<compile_context>
chip_gen: v7x
topology: tpu7x:2x2x1
jax: 0.10.0
libtpu: 0.0.40
codegen_flags: <defaults>
</compile_context>

<pallas_src>
import functools

import jax
import jax.numpy as jnp
from jax.experimental import pallas as pl
from jax.experimental.pallas import tpu as pltpu

GAMMA_HC = 3.0   # applied as omp*omp*omp (VPU integer power)
GAMMA_LC = 0.5   # applied as sqrt (single EUP op)
ALPHA = 0.25
EPS = 1e-6
XI = 0.5         # num_epochs is None -> get_xi() == 0.5
# TODO(synk): label_smoothing, 'sum'/'none' reductions and epoch-varying xi are
# left at the module defaults (None / 'mean' / num_epochs=None).

_ROW_ALIGN = 32          # lcm of f32(8) / bf16(16) / int8(32) sublane tiling
_VMEM_LIMIT = 32 << 20   # > v5e's 16 MiB scoped default, fits v7x's 64 MiB VMEM


def _focal_kernel(logits_ref, labels_ref, w_ref, partial_ref, *, n_rows):
    rows, d = logits_ref.shape

    x = jnp.clip(logits_ref[...].astype(jnp.float32), -10.0, 10.0)
    y = labels_ref[...].astype(jnp.float32)
    pw = w_ref[...].astype(jnp.float32)

    # One shared transcendental: e = exp(-|x|) feeds both sigmoid and softplus.
    e = jnp.exp(-jnp.abs(x))
    r = pl.reciprocal(1.0 + e, approx=True)       # EUP vrcp instead of divide
    p = jnp.where(x >= 0.0, r, e * r)             # numerically-stable sigmoid
    p = jnp.clip(p, EPS, 1.0 - EPS)

    # binary_cross_entropy_with_logits with pos_weight (PyTorch stable form):
    #   log_weight = 1 + (pos_weight - 1) * target
    #   loss = (1 - target) * input
    #        + log_weight * (log1p(exp(-|input|)) + max(-input, 0))
    log_weight = 1.0 + (pw - 1.0) * y
    ce = (1.0 - y) * x + log_weight * (jnp.log1p(e) + jnp.maximum(-x, 0.0))

    pt = jnp.clip(y * p + (1.0 - y) * (1.0 - p), EPS, 1.0)
    omp = 1.0 - pt                                # in [0, 1 - eps]
    fw = XI * (omp * omp * omp) + (1.0 - XI) * jnp.sqrt(omp)
    alpha_t = ALPHA * y + (1.0 - ALPHA) * (1.0 - y)
    focal = alpha_t * ce * fw

    def _fold(t):
        # (rows, d) -> (8, d) sublane-group partial sum (layout-preserving).
        return jnp.sum(t.reshape(rows // 8, 8, d), axis=0)

    if n_rows % rows == 0:
        # No tile is ever ragged: the row mask is never emitted.
        partial_ref[...] = _fold(focal)
    else:
        i = pl.program_id(0)
        is_last = i == pl.num_programs(0) - 1

        @pl.when(jnp.logical_not(is_last))
        def _():
            partial_ref[...] = _fold(focal)

        @pl.when(is_last)
        def _():
            # Only the last tile is partial: mask padded rows before folding.
            local_row = jax.lax.broadcasted_iota(jnp.int32, (rows, d), 0)
            valid = (i * rows + local_row) < n_rows
            partial_ref[...] = _fold(jnp.where(valid, focal, 0.0))


def _round_up(x, m):
    return ((x + m - 1) // m) * m


def _choose_block_rows(n, d, itemsizes):
    """Byte-targeted, VMEM-budget-aware and megacore-aware tile height."""
    bytes_per_row = d * sum(itemsizes)                 # all 3 inputs, one row
    # ~8 MiB of combined input reads per grid step (amortizes ~0.35 us/step).
    rows_bytes = max(_ROW_ALIGN, (8 << 20) // bytes_per_row)
    # <= ~24 MiB of double-buffered input tiles in VMEM (portable to v7x).
    rows_vmem = max(_ROW_ALIGN, (24 << 20) // (2 * bytes_per_row))
    # Keep >= 8 grid steps if each step still reads >= 1 MiB, else >= 2 steps,
    # so both v7x TensorCores are used and small-N padding waste is bounded.
    rows_cap8 = _round_up(pl.cdiv(n, 8), _ROW_ALIGN)
    rows_cap2 = _round_up(pl.cdiv(n, 2), _ROW_ALIGN)
    rows_mega = rows_cap8 if rows_cap8 * bytes_per_row >= (1 << 20) else rows_cap2
    rows = min(rows_bytes, rows_vmem, rows_mega)
    return max(_ROW_ALIGN, (rows // _ROW_ALIGN) * _ROW_ALIGN)


@functools.partial(jax.jit, static_argnames=("block_rows",))
def cyclical_focal_loss(logits, labels, label_weights, block_rows=None):
    """Returns (mean focal loss, xi) — matches the torch module forward."""
    n, d = logits.shape
    if block_rows is None:
        itemsizes = [jnp.dtype(a.dtype).itemsize
                     for a in (logits, labels, label_weights)]
        block_rows = _choose_block_rows(n, d, itemsizes)
    assert block_rows % _ROW_ALIGN == 0, "block_rows must be a multiple of 32"
    num_blocks = pl.cdiv(n, block_rows)

    row_spec = pl.BlockSpec((block_rows, d), lambda i: (i, 0))
    out_spec = pl.BlockSpec((8, d), lambda i: (i, 0))   # lane-dense partials

    partials = pl.pallas_call(
        functools.partial(_focal_kernel, n_rows=n),
        out_shape=jax.ShapeDtypeStruct((num_blocks * 8, d), jnp.float32),
        grid_spec=pltpu.PrefetchScalarGridSpec(
            num_scalar_prefetch=0,
            grid=(num_blocks,),
            in_specs=[row_spec, row_spec, row_spec],
            out_specs=out_spec,
        ),
        compiler_params=pltpu.CompilerParams(
            dimension_semantics=("parallel",),   # both TCs usable on v7x
            vmem_limit_bytes=_VMEM_LIMIT,
        ),
    )(logits, labels, label_weights)

    mean_loss = jnp.sum(partials) / jnp.float32(n * d)
    return mean_loss, jnp.float32(XI)


def _reference(logits, labels, label_weights):
    """Pure-JAX mirror of the torch forward, for verification."""
    x = jnp.clip(logits.astype(jnp.float32), -10.0, 10.0)
    y = labels.astype(jnp.float32)
    pw = label_weights.astype(jnp.float32)
    p = jnp.clip(jax.nn.sigmoid(x), EPS, 1.0 - EPS)
    log_weight = 1.0 + (pw - 1.0) * y
    ce = (1.0 - y) * x + log_weight * (
        jnp.log1p(jnp.exp(-jnp.abs(x))) + jnp.maximum(-x, 0.0)
    )
    pt = jnp.clip(y * p + (1.0 - y) * (1.0 - p), EPS, 1.0)
    focal = XI * jnp.power(1.0 - pt, GAMMA_HC) * ce \
        + (1.0 - XI) * jnp.power(1.0 - pt, GAMMA_LC) * ce
    alpha_t = ALPHA * y + (1.0 - ALPHA) * (1.0 - y)
    return jnp.mean(alpha_t * focal), jnp.float32(XI)


if __name__ == "__main__":
    key = jax.random.PRNGKey(0)
    k1, k2, k3 = jax.random.split(key, 3)

    # Small point-wise binary-classification batch; 300 rows deliberately
    # exercises the ragged-last-tile path. Labels/weights use narrow HBM
    # dtypes (int8 / bf16) — the kernel upcasts in-register.
    N, D = 300, 128
    logits = jax.random.normal(k1, (N, D), dtype=jnp.float32) * 3.0
    labels = jax.random.bernoulli(k2, 0.4, (N, D)).astype(jnp.int8)
    label_weights = jax.random.uniform(
        k3, (N, D), dtype=jnp.float32, minval=0.5, maxval=2.0
    ).astype(jnp.bfloat16)

    ref_loss, ref_xi = _reference(logits, labels, label_weights)

    # Auto-tiled: byte-targeted tile, >= 2 grid steps, ragged last tile masked.
    loss, xi = cyclical_focal_loss(logits, labels, label_weights)
    loss = jax.block_until_ready(loss)
    assert jnp.allclose(loss, ref_loss, rtol=1e-3, atol=1e-6), (loss, ref_loss)
    assert float(xi) == float(ref_xi)

    # Explicit small tile: 4 blocks, last one ragged (300 = 3*96 + 12).
    loss2, _ = cyclical_focal_loss(logits, labels, label_weights, block_rows=96)
    loss2 = jax.block_until_ready(loss2)
    assert jnp.allclose(loss2, ref_loss, rtol=1e-3, atol=1e-6), (loss2, ref_loss)

    # Evenly divisible case: the ragged-row mask is never emitted.
    ref3, _ = _reference(logits[:256], labels[:256], label_weights[:256])
    loss3, _ = cyclical_focal_loss(
        logits[:256], labels[:256], label_weights[:256], block_rows=64)
    loss3 = jax.block_until_ready(loss3)
    assert jnp.allclose(loss3, ref3, rtol=1e-3, atol=1e-6), (loss3, ref3)

    print("KERNEL_OK")
</pallas_src>

<mosaic_0001>
module attributes {stable_mosaic.version = 11 : i64} {
  func.func @_focal_kernel(%arg0: i32, %arg1: memref<160x128xf32, #tpu.memory_space<vmem>>, %arg2: memref<160x128xi8, #tpu.memory_space<vmem>>, %arg3: memref<160x128xbf16, #tpu.memory_space<vmem>>, %arg4: memref<8x128xf32, #tpu.memory_space<vmem>>) attributes {dimension_semantics = [#tpu.dimension_semantics<parallel>], iteration_bounds = array<i64: 2>, scalar_prefetch = 0 : i64, scratch_operands = 0 : i64, tpu.core_type = #tpu.core_type<tc>, window_params = [{transform_indices = @transform_0, window_bounds = array<i64: 160, 128>}, {transform_indices = @transform_1, window_bounds = array<i64: 160, 128>}, {transform_indices = @transform_2, window_bounds = array<i64: 160, 128>}, {transform_indices = @transform_3, window_bounds = array<i64: 8, 128>}]} {
    %c0 = arith.constant 0 : index
    %c0_0 = arith.constant 0 : index
    %0 = vector.load %arg1[%c0, %c0_0] : memref<160x128xf32, #tpu.memory_space<vmem>>, vector<160x128xf32>
    %cst = arith.constant -1.000000e+01 : f32
    %cst_1 = arith.constant 1.000000e+01 : f32
    %1 = vector.broadcast %cst : f32 to vector<160x128xf32>
    %2 = arith.maximumf %1, %0 : vector<160x128xf32>
    %3 = vector.broadcast %cst_1 : f32 to vector<160x128xf32>
    %4 = arith.minimumf %3, %2 : vector<160x128xf32>
    %c0_2 = arith.constant 0 : index
    %c0_3 = arith.constant 0 : index
    %5 = vector.load %arg2[%c0_2, %c0_3] : memref<160x128xi8, #tpu.memory_space<vmem>>, vector<160x128xi8>
    %6 = arith.sitofp %5 : vector<160x128xi8> to vector<160x128xf32>
    %c0_4 = arith.constant 0 : index
    %c0_5 = arith.constant 0 : index
    %7 = vector.load %arg3[%c0_4, %c0_5] : memref<160x128xbf16, #tpu.memory_space<vmem>>, vector<160x128xbf16>
    %8 = arith.extf %7 : vector<160x128xbf16> to vector<160x128xf32>
    %9 = math.absf %4 : vector<160x128xf32>
    %cst_6 = arith.constant 0.000000e+00 : f32
    %10 = vector.broadcast %cst_6 : f32 to vector<160x128xf32>
    %11 = arith.subf %10, %9 : vector<160x128xf32>
    %12 = math.exp %11 : vector<160x128xf32>
    %cst_7 = arith.constant 1.000000e+00 : f32
    %13 = vector.broadcast %cst_7 : f32 to vector<160x128xf32>
    %14 = arith.addf %13, %12 : vector<160x128xf32>
    %15 = tpu.reciprocal %14 {approx = true} : vector<160x128xf32> -> vector<160x128xf32>
    %cst_8 = arith.constant 0.000000e+00 : f32
    %16 = vector.broadcast %cst_8 : f32 to vector<160x128xf32>
    %17 = arith.cmpf oge, %4, %16 : vector<160x128xf32>
    %18 = arith.mulf %12, %15 : vector<160x128xf32>
    %19 = arith.select %17, %15, %18 : vector<160x128xi1>, vector<160x128xf32>
    %cst_9 = arith.constant 9.99999997E-7 : f32
    %cst_10 = arith.constant 0.999998986 : f32
    %20 = vector.broadcast %cst_9 : f32 to vector<160x128xf32>
    %21 = arith.maximumf %20, %19 : vector<160x128xf32>
    %22 = vector.broadcast %cst_10 : f32 to vector<160x128xf32>
    %23 = arith.minimumf %22, %21 : vector<160x128xf32>
    %cst_11 = arith.constant 1.000000e+00 : f32
    %24 = vector.broadcast %cst_11 : f32 to vector<160x128xf32>
    %25 = arith.subf %8, %24 : vector<160x128xf32>
    %26 = arith.mulf %25, %6 : vector<160x128xf32>
    %cst_12 = arith.constant 1.000000e+00 : f32
    %27 = vector.broadcast %cst_12 : f32 to vector<160x128xf32>
    %28 = arith.addf %27, %26 : vector<160x128xf32>
    %cst_13 = arith.constant 1.000000e+00 : f32
    %29 = vector.broadcast %cst_13 : f32 to vector<160x128xf32>
    %30 = arith.subf %29, %6 : vector<160x128xf32>
    %31 = arith.mulf %30, %4 : vector<160x128xf32>
    %32 = math.log1p %12 : vector<160x128xf32>
    %cst_14 = arith.constant 0.000000e+00 : f32
    %33 = vector.broadcast %cst_14 : f32 to vector<160x128xf32>
    %34 = arith.subf %33, %4 : vector<160x128xf32>
    %cst_15 = arith.constant 0.000000e+00 : f32
    %35 = vector.broadcast %cst_15 : f32 to vector<160x128xf32>
    %36 = arith.maximumf %34, %35 : vector<160x128xf32>
    %37 = arith.addf %32, %36 : vector<160x128xf32>
    %38 = arith.mulf %28, %37 : vector<160x128xf32>
    %39 = arith.addf %31, %38 : vector<160x128xf32>
    %40 = arith.mulf %6, %23 : vector<160x128xf32>
    %cst_16 = arith.constant 1.000000e+00 : f32
    %41 = vector.broadcast %cst_16 : f32 to vector<160x128xf32>
    %42 = arith.subf %41, %6 : vector<160x128xf32>
    %cst_17 = arith.constant 1.000000e+00 : f32
    %43 = vector.broadcast %cst_17 : f32 to vector<160x128xf32>
    %44 = arith.subf %43, %23 : vector<160x128xf32>
    %45 = arith.mulf %42, %44 : vector<160x128xf32>
    %46 = arith.addf %40, %45 : vector<160x128xf32>
    %cst_18 = arith.constant 9.99999997E-7 : f32
    %cst_19 = arith.constant 1.000000e+00 : f32
    %47 = vector.broadcast %cst_18 : f32 to vector<160x128xf32>
    %48 = arith.maximumf %47, %46 : vector<160x128xf32>
    %49 = vector.broadcast %cst_19 : f32 to vector<160x128xf32>
    %50 = arith.minimumf %49, %48 : vector<160x128xf32>
    %cst_20 = arith.constant 1.000000e+00 : f32
    %51 = vector.broadcast %cst_20 : f32 to vector<160x128xf32>
    %52 = arith.subf %51, %50 : vector<160x128xf32>
    %53 = arith.mulf %52, %52 : vector<160x128xf32>
    %54 = arith.mulf %53, %52 : vector<160x128xf32>
    %cst_21 = arith.constant 5.000000e-01 : f32
    %55 = vector.broadcast %cst_21 : f32 to vector<160x128xf32>
    %56 = arith.mulf %55, %54 : vector<160x128xf32>
    %57 = math.sqrt %52 : vector<160x128xf32>
    %cst_22 = arith.constant 5.000000e-01 : f32
    %58 = vector.broadcast %cst_22 : f32 to vector<160x128xf32>
    %59 = arith.mulf %58, %57 : vector<160x128xf32>
    %60 = arith.addf %56, %59 : vector<160x128xf32>
    %cst_23 = arith.constant 2.500000e-01 : f32
    %61 = vector.broadcast %cst_23 : f32 to vector<160x128xf32>
    %62 = arith.mulf %61, %6 : vector<160x128xf32>
    %cst_24 = arith.constant 1.000000e+00 : f32
    %63 = vector.broadcast %cst_24 : f32 to vector<160x128xf32>
    %64 = arith.subf %63, %6 : vector<160x128xf32>
    %cst_25 = arith.constant 7.500000e-01 : f32
    %65 = vector.broadcast %cst_25 : f32 to vector<160x128xf32>
    %66 = arith.mulf %65, %64 : vector<160x128xf32>
    %67 = arith.addf %62, %66 : vector<160x128xf32>
    %68 = arith.mulf %67, %39 : vector<160x128xf32>
    %69 = arith.mulf %68, %60 : vector<160x128xf32>
    %c1_i32 = arith.constant 1 : i32
    %70 = arith.cmpi eq, %arg0, %c1_i32 : i32
    %true = arith.constant true
    %71 = arith.xori %70, %true : i1
    %72 = arith.extui %71 : i1 to i32
    %c0_i32 = arith.constant 0 : i32
    %73 = arith.cmpi ne, %72, %c0_i32 : i32
    scf.if %73 {
      %76 = vector.shape_cast %69 : vector<160x128xf32> to vector<20x8x128xf32>
      %cst_27 = arith.constant dense<0.000000e+00> : vector<8x128xf32>
      %77 = vector.multi_reduction <add>, %76, %cst_27 [0] : vector<20x8x128xf32> to vector<8x128xf32>
      %c0_28 = arith.constant 0 : index
      %c0_29 = arith.constant 0 : index
      %78 = vector.load %arg4[%c0_28, %c0_29] : memref<8x128xf32, #tpu.memory_space<vmem>>, vector<8x128xf32>
      tpu.vector_store %arg4[%c0_28, %c0_29], %77 {strides = array<i32>} : memref<8x128xf32, #tpu.memory_space<vmem>>, vector<8x128xf32>,
    } else {
    }
    %74 = arith.extui %70 : i1 to i32
    %c0_i32_26 = arith.constant 0 : i32
    %75 = arith.cmpi ne, %74, %c0_i32_26 : i32
    scf.if %75 {
      %76 = tpu.iota {dimensions = array<i32: 0>} : vector<160x128xi32>
      %c160_i32 = arith.constant 160 : i32
      %77 = arith.muli %arg0, %c160_i32 : i32
      %78 = vector.broadcast %77 : i32 to vector<160x128xi32>
      %79 = arith.addi %78, %76 : vector<160x128xi32>
      %c300_i32 = arith.constant 300 : i32
      %80 = vector.broadcast %c300_i32 : i32 to vector<160x128xi32>
      %81 = arith.cmpi slt, %79, %80 : vector<160x128xi32>
      %cst_27 = arith.constant 0.000000e+00 : f32
      %82 = vector.broadcast %cst_27 : f32 to vector<160x128xf32>
      %83 = arith.select %81, %69, %82 : vector<160x128xi1>, vector<160x128xf32>
      %84 = vector.shape_cast %83 : vector<160x128xf32> to vector<20x8x128xf32>
      %cst_28 = arith.constant dense<0.000000e+00> : vector<8x128xf32>
      %85 = vector.multi_reduction <add>, %84, %cst_28 [0] : vector<20x8x128xf32> to vector<8x128xf32>
      %c0_29 = arith.constant 0 : index
      %c0_30 = arith.constant 0 : index
      %86 = vector.load %arg4[%c0_29, %c0_30] : memref<8x128xf32, #tpu.memory_space<vmem>>, vector<8x128xf32>
      tpu.vector_store %arg4[%c0_29, %c0_30], %85 {strides = array<i32>} : memref<8x128xf32, #tpu.memory_space<vmem>>, vector<8x128xf32>,
    } else {
    }
    return
  }
  func.func @transform_0(%arg0: i32) -> (i32, i32) {
    %c0_i32 = arith.constant 0 : i32
    %c0_i32_0 = arith.constant 0 : i32
    return %arg0, %c0_i32 : i32, i32
  }
  func.func @transform_1(%arg0: i32) -> (i32, i32) {
    %c0_i32 = arith.constant 0 : i32
    %c0_i32_0 = arith.constant 0 : i32
    return %arg0, %c0_i32 : i32, i32
  }
  func.func @transform_2(%arg0: i32) -> (i32, i32) {
    %c0_i32 = arith.constant 0 : i32
    %c0_i32_0 = arith.constant 0 : i32
    return %arg0, %c0_i32 : i32, i32
  }
  func.func @transform_3(%arg0: i32) -> (i32, i32) {
    %c0_i32 = arith.constant 0 : i32
    %c0_i32_0 = arith.constant 0 : i32
    return %arg0, %c0_i32 : i32, i32
  }
}

</mosaic_0001>

<llo_original>
// kernel: cyclical_focal_loss.1
$region0: #{cyclical_focal_loss.1}
  #allocation0 [shape = 'u32[]', space=smem, size = 0x4, offset = 0x4, fixed_abs, tag = 'smem constant byte address 0x4 - core index']
  #allocation1 [shape = 'u32[144,128]{1,0:T(1,128)}', space=vmem, size = 0x12000, scoped, tag = 'internal scratch']
  %s0 = inlined_call_operand.hbm [shape: f32[300,128], index: 0, kind: input, shape index: {}]
  %s1 = inlined_call_operand.hbm [shape: s8[300,128], index: 1, kind: input, shape index: {}]
  %s2 = inlined_call_operand.hbm [shape: bf16[300,128], index: 2, kind: input, shape index: {}]
  %s3 = inlined_call_operand.vmem [shape: f32[16,128], index: 3, kind: output, shape index: {}]
  %s4 = sld [smem:[#allocation0]]
  $region65: #{cyclical_focal_loss.1} parent=0
    _
  %s6 = ssub.s32 1, %s4
  %s7 = scalar_select 0, %s6, %s4
  $region1: #{cyclical_focal_loss.1} parent=0
    #allocation2 [shape = 'u8[163840]{0}', space=vmem, size = 0x28000, scoped, tag = 'input window, operand 0']
    #allocation3 [shape = 's32[2]{0}', space=sflag, size = 0x8, scoped, tag = 'scoped memory for cyclical_focal_loss.1']
    #allocation4 [shape = 'u8[40960]{0}', space=vmem, size = 0xa000, scoped, tag = 'input window, operand 1']
    #allocation5 [shape = 's32[2]{0}', space=sflag, size = 0x8, scoped, tag = 'scoped memory for cyclical_focal_loss.1']
    #allocation6 [shape = 'u8[81920]{0}', space=vmem, size = 0x14000, scoped, tag = 'input window, operand 2']
    %8 = vsyncpa [#allocation3], 0
    %s9 = scalar_lea.sflag [#allocation3], 1
    %10 = vsyncpa %s9, 0
    %11 = vsyncpa [#allocation5], 0
    %s12 = scalar_lea.sflag [#allocation5], 1
    %13 = vsyncpa %s12, 0
    loop: start=0, step=1, limit=4
    $region2: #{cyclical_focal_loss.1} parent=1 // loop_pre_header
      _
    $region3: #{cyclical_focal_loss.1} parent=1 // loop_header
      %s15 = sphi 0, %s19
      %p16 = scmp.ge.s32.totalorder %s15, 4
      %s25 = sphi 0, %s27
      %s28 = sphi 0, %s25
      %s29 = sphi 0, %s28
      %s45 = sphi 0, %s29
      %s51 = sphi 0, %s53
      %s54 = sphi 0, %s51
      %s55 = sphi 0, %s54
      %s71 = sphi 0, %s55
      %s77 = sphi 0, %s79
      %s80 = sphi 0, %s77
      %s81 = sphi 0, %s80
      %s97 = sphi 0, %s81
      %s103 = sphi 0, %s105
      %s106 = sphi 0, %s103
      %s107 = sphi 0, %s106
      %s123 = sphi 0, %s107
    $region4: #{cyclical_focal_loss.1} parent=1 // loop_header_branch
      %18 = sbr.rel (%p16) target = $region8
    $region5: #{cyclical_focal_loss.1} parent=1 // loop_body
      %s20 = ssub.s32 %s15, 1
      %s21 = ssub.s32 %s15, 2
      %s22 = sadd.s32 %s15, 1
      %s23 = ssub.s32 %s15, %s22
      %p24 = scmp.eq.s32.totalorder %s23, 0
      %s26 = sadd.s32 %s25, 1
      %s27 = scalar_select %p24, %s25, %s26
      %p30 = pneg %p24
      %p31 = scmp.eq.s32.totalorder %s15, 1
      %p32 = por %p30, %p31
      %p33 = scmp.ne.s32.totalorder %s25, %s28
      %p34 = scmp.eq.s32.totalorder %s15, 0
      %p35 = por %p33, %p34
      %p36 = scmp.ne.s32.totalorder %s25, %s28
      %p37 = scmp.eq.s32.totalorder %s20, 1
      %p38 = por %p36, %p37
      %p39 = scmp.ne.s32.totalorder %s28, %s29
      %p40 = scmp.eq.s32.totalorder %s20, 0
      %p41 = por %p39, %p40
      %p42 = scmp.ne.s32.totalorder %s28, %s29
      %p43 = scmp.eq.s32.totalorder %s21, 1
      %p44 = por %p42, %p43
      %p46 = scmp.ne.s32.totalorder %s29, %s45
      %p47 = scmp.eq.s32.totalorder %s21, 0
      %p48 = por %p46, %p47
      %s49 = ssub.s32 %s15, %s22
      %p50 = scmp.eq.s32.totalorder %s49, 0
      %s52 = sadd.s32 %s51, 1
      %s53 = scalar_select %p50, %s51, %s52
      %p56 = pneg %p50
      %p57 = scmp.eq.s32.totalorder %s15, 1
      %p58 = por %p56, %p57
      %p59 = scmp.ne.s32.totalorder %s51, %s54
      %p60 = scmp.eq.s32.totalorder %s15, 0
      %p61 = por %p59, %p60
      %p62 = scmp.ne.s32.totalorder %s51, %s54
      %p63 = scmp.eq.s32.totalorder %s20, 1
      %p64 = por %p62, %p63
      %p65 = scmp.ne.s32.totalorder %s54, %s55
      %p66 = scmp.eq.s32.totalorder %s20, 0
      %p67 = por %p65, %p66
      %p68 = scmp.ne.s32.totalorder %s54, %s55
      %p69 = scmp.eq.s32.totalorder %s21, 1
      %p70 = por %p68, %p69
      %p72 = scmp.ne.s32.totalorder %s55, %s71
      %p73 = scmp.eq.s32.totalorder %s21, 0
      %p74 = por %p72, %p73
      %s75 = ssub.s32 %s15, %s22
      %p76 = scmp.eq.s32.totalorder %s75, 0
      %s78 = sadd.s32 %s77, 1
      %s79 = scalar_select %p76, %s77, %s78
      %p82 = pneg %p76
      %p83 = scmp.eq.s32.totalorder %s15, 1
      %p84 = por %p82, %p83
      %p85 = scmp.ne.s32.totalorder %s77, %s80
      %p86 = scmp.eq.s32.totalorder %s15, 0
      %p87 = por %p85, %p86
      %p88 = scmp.ne.s32.totalorder %s77, %s80
      %p89 = scmp.eq.s32.totalorder %s20, 1
      %p90 = por %p88, %p89
      %p91 = scmp.ne.s32.totalorder %s80, %s81
      %p92 = scmp.eq.s32.totalorder %s20, 0
      %p93 = por %p91, %p92
      %p94 = scmp.ne.s32.totalorder %s80, %s81
      %p95 = scmp.eq.s32.totalorder %s21, 1
      %p96 = por %p94, %p95
      %p98 = scmp.ne.s32.totalorder %s81, %s97
      %p99 = scmp.eq.s32.totalorder %s21, 0
      %p100 = por %p98, %p99
      %s101 = ssub.s32 %s15, %s22
      %p102 = scmp.eq.s32.totalorder %s101, 0
      %s104 = sadd.s32 %s103, 1
      %s105 = scalar_select %p102, %s103, %s104
      %p108 = pneg %p102
      %p109 = scmp.eq.s32.totalorder %s15, 1
      %p110 = por %p108, %p109
      %p111 = scmp.ne.s32.totalorder %s103, %s106
      %p112 = scmp.eq.s32.totalorder %s15, 0
      %p113 = por %p111, %p112
      %p114 = scmp.ne.s32.totalorder %s103, %s106
      %p115 = scmp.eq.s32.totalorder %s20, 1
      %p116 = por %p114, %p115
      %p117 = scmp.ne.s32.totalorder %s106, %s107
      %p118 = scmp.eq.s32.totalorder %s20, 0
      %p119 = por %p117, %p118
      %p120 = scmp.ne.s32.totalorder %s106, %s107
      %p121 = scmp.eq.s32.totalorder %s21, 1
      %p122 = por %p120, %p121
      %p124 = scmp.ne.s32.totalorder %s107, %s123
      %p125 = scmp.eq.s32.totalorder %s21, 0
      %p126 = por %p124, %p125
      %p127 = scmp.le.s32.totalorder 1, %s15
      %p128 = scmp.lt.s32.totalorder %s15, 3
      %p129 = pnand %p127, %p128
      %p130 = pneg %p129
      // Predicated region
      $region9: #{cyclical_focal_loss.1} parent=5 // pred_check
        _
      $region10: #{cyclical_focal_loss.1} parent=5 // pred_check_branch
        %132 = sbr.rel (%p129) target = $region12
      $region11: #{cyclical_focal_loss.1} parent=5 // pred_region
        %s133 = ssub.s32 %s15, 1
      $region12: #{cyclical_focal_loss.1} parent=5 // pred_fallthru
        _
      %p134 = scmp.lt.s32.totalorder %s15, 2
      // Predicated region
      $region13: #{cyclical_focal_loss.1} parent=5 // pred_check
        %p135 = pneg %p134
      $region14: #{cyclical_focal_loss.1} parent=5 // pred_check_branch
        %137 = sbr.rel (%p135) target = $region16
      $region15: #{cyclical_focal_loss.1} parent=5 // pred_region
        // Predicated region
        $region17: #{cyclical_focal_loss.1} parent=15 // pred_check
          %p138 = pneg %p35
        $region18: #{cyclical_focal_loss.1} parent=15 // pred_check_branch
          %140 = sbr.rel (%p138) target = $region20
        $region19: #{cyclical_focal_loss.1} parent=15 // pred_region
          %s141 = sand.u32 %s25, 1
          %s142 = scalar_lea.sflag [#allocation3], %s141
          %s143 = sand.u32 %s25, 1
          %s144 = smul.addr %s143, 160
          %s145 = scalar_lea.vmem [#allocation2], %s144
          %s146 = smul.u32 20, %s15
          %s147 = ssub.s32 38, %s146
          %p148 = scmp.lt.s32.totalorder %s147, 20
          %s149 = scalar_select %p148, %s147, 20
          %s150 = smul.u32 128, %s149
          %s152 = ssub.s32 2560, %s150
          %153 = vsyncadd %s142, %s152
          %p154 = scmp.ne.s32.totalorder 0, %s150
          %s155 = smul.addr %s146, 128
          %s156 = scalar_lea.hbm %s0, %s155
          %s157 = smul.u32 8, %s149
          %s158 = sshll.u32 %s145, 4
          %s159 = int_to_ptr.vmem [resolvable:$true] %s158
          %s160 = sshll.u32 %s157, 4
          %164 = dma.hbm_to_vmem [thread:$0]  (%p154), %s156, %s160, %s159, %s142, 128, 128, 8
        $region20: #{cyclical_focal_loss.1} parent=15 // pred_fallthru
          _
        // Predicated region
        $region21: #{cyclical_focal_loss.1} parent=15 // pred_check
          %p165 = pneg %p61
        $region22: #{cyclical_focal_loss.1} parent=15 // pred_check_branch
          %167 = sbr.rel (%p165) target = $region24
        $region23: #{cyclical_focal_loss.1} parent=15 // pred_region
          %s168 = sand.u32 %s15, 1
          %s169 = scalar_lea.sflag [#allocation5], %s168
          %s170 = sand.u32 %s51, 1
          %s171 = smul.addr %s170, 40
          %s172 = scalar_lea.vmem [#allocation4], %s171
          %s173 = smul.u32 20, %s15
          %s174 = ssub.s32 38, %s173
          %p175 = scmp.lt.s32.totalorder %s174, 20
          %s176 = scalar_select %p175, %s174, 20
          %s177 = smul.u32 32, %s176
          %s179 = ssub.s32 640, %s177
          %180 = vsyncadd %s169, %s179
          %p181 = scmp.ne.s32.totalorder 0, %s177
          %s182 = smul.addr %s173, 32
          %s183 = scalar_lea.hbm %s1, %s182
          %s184 = smul.u32 2, %s176
          %s185 = sshll.u32 %s172, 4
          %s186 = int_to_ptr.vmem [resolvable:$true] %s185
          %s187 = sshll.u32 %s184, 4
          %191 = dma.hbm_to_vmem [thread:$0]  (%p181), %s183, %s187, %s186, %s169, 32, 32, 2
        $region24: #{cyclical_focal_loss.1} parent=15 // pred_fallthru
          _
        // Predicated region
        $region25: #{cyclical_focal_loss.1} parent=15 // pred_check
          %p192 = pneg %p87
        $region26: #{cyclical_focal_loss.1} parent=15 // pred_check_branch
          %194 = sbr.rel (%p192) target = $region28
        $region27: #{cyclical_focal_loss.1} parent=15 // pred_region
          %s195 = sand.u32 %s15, 1
          %s196 = scalar_lea.sflag [#allocation5], %s195
          %s197 = sand.u32 %s77, 1
          %s198 = smul.addr %s197, 80
          %s199 = scalar_lea.vmem [#allocation6], %s198
          %s200 = smul.u32 20, %s15
          %s201 = ssub.s32 38, %s200
          %p202 = scmp.lt.s32.totalorder %s201, 20
          %s203 = scalar_select %p202, %s201, 20
          %s204 = smul.u32 64, %s203
          %s206 = ssub.s32 1280, %s204
          %207 = vsyncadd %s196, %s206
          %p208 = scmp.ne.s32.totalorder 0, %s204
          %s209 = smul.addr %s200, 64
          %s210 = scalar_lea.hbm %s2, %s209
          %s211 = smul.u32 4, %s203
          %s212 = sshll.u32 %s199, 4
          %s213 = int_to_ptr.vmem [resolvable:$true] %s212
          %s214 = sshll.u32 %s211, 4
          %218 = dma.hbm_to_vmem [thread:$0]  (%p208), %s210, %s214, %s213, %s196, 64, 64, 4
        $region28: #{cyclical_focal_loss.1} parent=15 // pred_fallthru
          _
      $region16: #{cyclical_focal_loss.1} parent=5 // pred_fallthru
        _
      %p219 = scmp.le.s32.totalorder 1, %s15
      %p220 = scmp.lt.s32.totalorder %s15, 3
      %p221 = pnand %p219, %p220
      %p222 = pneg %p221
      // Predicated region
      $region29: #{cyclical_focal_loss.1} parent=5 // pred_check
        _
      $region30: #{cyclical_focal_loss.1} parent=5 // pred_check_branch
        %224 = sbr.rel (%p221) target = $region32
      $region31: #{cyclical_focal_loss.1} parent=5 // pred_region
        %s225 = ssub.s32 %s15, 1
        %s226 = sand.u32 %s28, 1
        %s227 = scalar_lea.sflag [#allocation3], %s226
        %s228 = sand.u32 %s28, 1
        %s229 = smul.addr %s228, 160
        %s230 = scalar_lea.vmem [#allocation2], %s229
        // Predicated region
        $region33: #{cyclical_focal_loss.1} parent=31 // pred_check
          %p231 = pneg %p41
        $region34: #{cyclical_focal_loss.1} parent=31 // pred_check_branch
          %233 = sbr.rel (%p231) target = $region36
        $region35: #{cyclical_focal_loss.1} parent=31 // pred_region
          %234 = dma.done %s227, 2560
        $region36: #{cyclical_focal_loss.1} parent=31 // pred_fallthru
          _
        %s235 = sand.u32 %s20, 1
        %s236 = scalar_lea.sflag [#allocation5], %s235
        %s237 = sand.u32 %s54, 1
        %s238 = smul.addr %s237, 40
        %s239 = scalar_lea.vmem [#allocation4], %s238
        // Predicated region
        $region37: #{cyclical_focal_loss.1} parent=31 // pred_check
          %p240 = pneg %p67
        $region38: #{cyclical_focal_loss.1} parent=31 // pred_check_branch
          %242 = sbr.rel (%p240) target = $region40
        $region39: #{cyclical_focal_loss.1} parent=31 // pred_region
          %243 = dma.done %s236, 640
        $region40: #{cyclical_focal_loss.1} parent=31 // pred_fallthru
          _
        %s244 = sand.u32 %s20, 1
        %s245 = scalar_lea.sflag [#allocation5], %s244
        %s246 = sand.u32 %s80, 1
        %s247 = smul.addr %s246, 80
        %s248 = scalar_lea.vmem [#allocation6], %s247
        // Predicated region
        $region41: #{cyclical_focal_loss.1} parent=31 // pred_check
          %p249 = pneg %p93
        $region42: #{cyclical_focal_loss.1} parent=31 // pred_check_branch
          %251 = sbr.rel (%p249) target = $region44
        $region43: #{cyclical_focal_loss.1} parent=31 // pred_region
          %252 = dma.done %s245, 1280
        $region44: #{cyclical_focal_loss.1} parent=31 // pred_fallthru
          _
        %s253 = sand.u32 %s28, 1
        %s254 = scalar_lea.sflag [#allocation3], %s253
        %s255 = sand.u32 %s28, 1
        %s256 = smul.addr %s255, 160
        %s257 = scalar_lea.vmem [#allocation2], %s256
        %p258 = pneg %p41
        %p259 = pneg %p38
        %s260 = sand.u32 %s20, 1
        %s261 = scalar_lea.sflag [#allocation5], %s260
        %s262 = sand.u32 %s54, 1
        %s263 = smul.addr %s262, 40
        %s264 = scalar_lea.vmem [#allocation4], %s263
        %p265 = pneg %p67
        %p266 = pneg %p64
        %s267 = sand.u32 %s20, 1
        %s268 = scalar_lea.sflag [#allocation5], %s267
        %s269 = sand.u32 %s80, 1
        %s270 = smul.addr %s269, 80
        %s271 = scalar_lea.vmem [#allocation6], %s270
        %p272 = pneg %p93
        %p273 = pneg %p90
        %p274 = pneg %p119
        %p275 = pneg %p116
        %p276 = scmp.lt.s32.totalorder %s20, 1
        %s277 = scalar_select %p276, %s20, 1
        %s278 = smul.addr %s277, 8
        %s279 = scalar_lea.vmem %s3, %s278
        %s280 = smul.u32 20, %s20
        %s281 = ssub.s32 38, %s280
        %p282 = scmp.lt.s32.totalorder %s281, 20
        %s283 = scalar_select %p282, %s281, 20
        %s284 = smul.u32 128, %s283
        %s285 = smul.u32 20, %s20
        %s286 = ssub.s32 38, %s285
        %p287 = scmp.lt.s32.totalorder %s286, 20
        %s288 = scalar_select %p287, %s286, 20
        %s289 = smul.u32 32, %s288
        %s290 = smul.u32 20, %s20
        %s291 = ssub.s32 38, %s290
        %p292 = scmp.lt.s32.totalorder %s291, 20
        %s293 = scalar_select %p292, %s291, 20
        %s294 = smul.u32 64, %s293
        %p295 = scmp.lt.s32.totalorder %s20, 1
        %s296 = scalar_select %p295, %s20, 1
        %s297 = smul.addr %s296, 8
        %s298 = scalar_lea.vmem %s3, %s297
        %v299 = vld [vmem:[%s230] sm:$0xff]
        %v300 = vld [vmem:[%s230 + $0x8] sm:$0xff]
        %v301 = vld [vmem:[%s230 + $0x10] sm:$0xff]
        %v302 = vld [vmem:[%s230 + $0x18] sm:$0xff]
        %v303 = vld [vmem:[%s230 + $0x20] sm:$0xff]
        %v304 = vld [vmem:[%s230 + $0x28] sm:$0xff]
        %v305 = vld [vmem:[%s230 + $0x30] sm:$0xff]
        %v306 = vld [vmem:[%s230 + $0x38] sm:$0xff]
        %v307 = vld [vmem:[%s230 + $0x40] sm:$0xff]
        %v308 = vld [vmem:[%s230 + $0x48] sm:$0xff]
        %v309 = vld [vmem:[%s230 + $0x50] sm:$0xff]
        %v310 = vld [vmem:[%s230 + $0x58] sm:$0xff]
        %v311 = vld [vmem:[%s230 + $0x60] sm:$0xff]
        %v312 = vld [vmem:[%s230 + $0x68] sm:$0xff]
        %v313 = vld [vmem:[%s230 + $0x70] sm:$0xff]
        %v314 = vld [vmem:[%s230 + $0x78] sm:$0xff]
        %v315 = vld [vmem:[%s230 + $0x80] sm:$0xff]
        %v316 = vld [vmem:[%s230 + $0x88] sm:$0xff]
        %v317 = vld [vmem:[%s230 + $0x90] sm:$0xff]
        %v318 = vld [vmem:[%s230 + $0x98] sm:$0xff]
        %v319 = vmax.f32 %v299, -10.0
        %v320 = vmax.f32 %v300, -10.0
        %v321 = vmax.f32 %v301, -10.0
        %v322 = vmax.f32 %v302, -10.0
        %v323 = vmax.f32 %v303, -10.0
        %v324 = vmax.f32 %v304, -10.0
        %v325 = vmax.f32 %v305, -10.0
        %v326 = vmax.f32 %v306, -10.0
        %v327 = vmax.f32 %v307, -10.0
        %v328 = vmax.f32 %v308, -10.0
        %v329 = vmax.f32 %v309, -10.0
        %v330 = vmax.f32 %v310, -10.0
        %v331 = vmax.f32 %v311, -10.0
        %v332 = vmax.f32 %v312, -10.0
        %v333 = vmax.f32 %v313, -10.0
        %v334 = vmax.f32 %v314, -10.0
        %v335 = vmax.f32 %v315, -10.0
        %v336 = vmax.f32 %v316, -10.0
        %v337 = vmax.f32 %v317, -10.0
        %v338 = vmax.f32 %v318, -10.0
        %v339 = vmin.f32 %v319, 10.0
        %v340 = vmin.f32 %v320, 10.0
        %v341 = vmin.f32 %v321, 10.0
        %v342 = vmin.f32 %v322, 10.0
        %v343 = vmin.f32 %v323, 10.0
        %v344 = vmin.f32 %v324, 10.0
        %v345 = vmin.f32 %v325, 10.0
        %v346 = vmin.f32 %v326, 10.0
        %v347 = vmin.f32 %v327, 10.0
        %v348 = vmin.f32 %v328, 10.0
        %v349 = vmin.f32 %v329, 10.0
        %v350 = vmin.f32 %v330, 10.0
        %v351 = vmin.f32 %v331, 10.0
        %v352 = vmin.f32 %v332, 10.0
        %v353 = vmin.f32 %v333, 10.0
        %v354 = vmin.f32 %v334, 10.0
        %v355 = vmin.f32 %v335, 10.0
        %v356 = vmin.f32 %v336, 10.0
        %v357 = vmin.f32 %v337, 10.0
        %v358 = vmin.f32 %v338, 10.0
        %v359 = vld [vmem:[%s239] sm:$0x3]
        %v360 = vld [vmem:[%s239 + $0x2] sm:$0x3]
        %v361 = vld [vmem:[%s239 + $0x4] sm:$0x3]
        %v362 = vld [vmem:[%s239 + $0x6] sm:$0x3]
        %v363 = vld [vmem:[%s239 + $0x8] sm:$0x3]
        %v364 = vld [vmem:[%s239 + $0xa] sm:$0x3]
        %v365 = vld [vmem:[%s239 + $0xc] sm:$0x3]
        %v366 = vld [vmem:[%s239 + $0xe] sm:$0x3]
        %v367 = vld [vmem:[%s239 + $0x10] sm:$0x3]
        %v368 = vld [vmem:[%s239 + $0x12] sm:$0x3]
        %v369 = vld [vmem:[%s239 + $0x14] sm:$0x3]
        %v370 = vld [vmem:[%s239 + $0x16] sm:$0x3]
        %v371 = vld [vmem:[%s239 + $0x18] sm:$0x3]
        %v372 = vld [vmem:[%s239 + $0x1a] sm:$0x3]
        %v373 = vld [vmem:[%s239 + $0x1c] sm:$0x3]
        %v374 = vld [vmem:[%s239 + $0x1e] sm:$0x3]
        %v375 = vld [vmem:[%s239 + $0x20] sm:$0x3]
        %v376 = vld [vmem:[%s239 + $0x22] sm:$0x3]
        %v377 = vld [vmem:[%s239 + $0x24] sm:$0x3]
        %v378 = vld [vmem:[%s239 + $0x26] sm:$0x3]
        %v379 = vunpack.c.0.s8 %v359
        %v380 = vunpack.c.0.s8 %v360
        %v381 = vunpack.c.0.s8 %v361
        %v382 = vunpack.c.0.s8 %v362
        %v383 = vunpack.c.0.s8 %v363
        %v384 = vunpack.c.0.s8 %v364
        %v385 = vunpack.c.0.s8 %v365
        %v386 = vunpack.c.0.s8 %v366
        %v387 = vunpack.c.0.s8 %v367
        %v388 = vunpack.c.0.s8 %v368
        %v389 = vunpack.c.0.s8 %v369
        %v390 = vunpack.c.0.s8 %v370
        %v391 = vunpack.c.0.s8 %v371
        %v392 = vunpack.c.0.s8 %v372
        %v393 = vunpack.c.0.s8 %v373
        %v394 = vunpack.c.0.s8 %v374
        %v395 = vunpack.c.0.s8 %v375
        %v396 = vunpack.c.0.s8 %v376
        %v397 = vunpack.c.0.s8 %v377
        %v398 = vunpack.c.0.s8 %v378
        %v399 = vcvt.s32.f32 %v379
        %v400 = vcvt.s32.f32 %v380
        %v401 = vcvt.s32.f32 %v381
        %v402 = vcvt.s32.f32 %v382
        %v403 = vcvt.s32.f32 %v383
        %v404 = vcvt.s32.f32 %v384
        %v405 = vcvt.s32.f32 %v385
        %v406 = vcvt.s32.f32 %v386
        %v407 = vcvt.s32.f32 %v387
        %v408 = vcvt.s32.f32 %v388
        %v409 = vcvt.s32.f32 %v389
        %v410 = vcvt.s32.f32 %v390
        %v411 = vcvt.s32.f32 %v391
        %v412 = vcvt.s32.f32 %v392
        %v413 = vcvt.s32.f32 %v393
        %v414 = vcvt.s32.f32 %v394
        %v415 = vcvt.s32.f32 %v395
        %v416 = vcvt.s32.f32 %v396
        %v417 = vcvt.s32.f32 %v397
        %v418 = vcvt.s32.f32 %v398
        %v419 = vld [vmem:[%s248] sm:$0xf]
        %v420 = vld [vmem:[%s248 + $0x4] sm:$0xf]
        %v421 = vld [vmem:[%s248 + $0x8] sm:$0xf]
        %v422 = vld [vmem:[%s248 + $0xc] sm:$0xf]
        %v423 = vld [vmem:[%s248 + $0x10] sm:$0xf]
        %v424 = vld [vmem:[%s248 + $0x14] sm:$0xf]
        %v425 = vld [vmem:[%s248 + $0x18] sm:$0xf]
        %v426 = vld [vmem:[%s248 + $0x1c] sm:$0xf]
        %v427 = vld [vmem:[%s248 + $0x20] sm:$0xf]
        %v428 = vld [vmem:[%s248 + $0x24] sm:$0xf]
        %v429 = vld [vmem:[%s248 + $0x28] sm:$0xf]
        %v430 = vld [vmem:[%s248 + $0x2c] sm:$0xf]
        %v431 = vld [vmem:[%s248 + $0x30] sm:$0xf]
        %v432 = vld [vmem:[%s248 + $0x34] sm:$0xf]
        %v433 = vld [vmem:[%s248 + $0x38] sm:$0xf]
        %v434 = vld [vmem:[%s248 + $0x3c] sm:$0xf]
        %v435 = vld [vmem:[%s248 + $0x40] sm:$0xf]
        %v436 = vld [vmem:[%s248 + $0x44] sm:$0xf]
        %v437 = vld [vmem:[%s248 + $0x48] sm:$0xf]
        %v438 = vld [vmem:[%s248 + $0x4c] sm:$0xf]
        %v439 = vunpack.c.l.bf16 %v419
        %v440 = vunpack.c.l.bf16 %v420
        %v441 = vunpack.c.l.bf16 %v421
        %v442 = vunpack.c.l.bf16 %v422
        %v443 = vunpack.c.l.bf16 %v423
        %v444 = vunpack.c.l.bf16 %v424
        %v445 = vunpack.c.l.bf16 %v425
        %v446 = vunpack.c.l.bf16 %v426
        %v447 = vunpack.c.l.bf16 %v427
        %v448 = vunpack.c.l.bf16 %v428
        %v449 = vunpack.c.l.bf16 %v429
        %v450 = vunpack.c.l.bf16 %v430
        %v451 = vunpack.c.l.bf16 %v431
        %v452 = vunpack.c.l.bf16 %v432
        %v453 = vunpack.c.l.bf16 %v433
        %v454 = vunpack.c.l.bf16 %v434
        %v455 = vunpack.c.l.bf16 %v435
        %v456 = vunpack.c.l.bf16 %v436
        %v457 = vunpack.c.l.bf16 %v437
        %v458 = vunpack.c.l.bf16 %v438
        %v459 = vand.u32 2147483647, %v339
        %v460 = vand.u32 2147483647, %v340
        %v461 = vand.u32 2147483647, %v341
        %v462 = vand.u32 2147483647, %v342
        %v463 = vand.u32 2147483647, %v343
        %v464 = vand.u32 2147483647, %v344
        %v465 = vand.u32 2147483647, %v345
        %v466 = vand.u32 2147483647, %v346
        %v467 = vand.u32 2147483647, %v347
        %v468 = vand.u32 2147483647, %v348
        %v469 = vand.u32 2147483647, %v349
        %v470 = vand.u32 2147483647, %v350
        %v471 = vand.u32 2147483647, %v351
        %v472 = vand.u32 2147483647, %v352
        %v473 = vand.u32 2147483647, %v353
        %v474 = vand.u32 2147483647, %v354
        %v475 = vand.u32 2147483647, %v355
        %v476 = vand.u32 2147483647, %v356
        %v477 = vand.u32 2147483647, %v357
        %v478 = vand.u32 2147483647, %v358
        %v479 = vsub.f32 0.0, %v459
        %v480 = vsub.f32 0.0, %v460
        %v481 = vsub.f32 0.0, %v461
        %v482 = vsub.f32 0.0, %v462
        %v483 = vsub.f32 0.0, %v463
        %v484 = vsub.f32 0.0, %v464
        %v485 = vsub.f32 0.0, %v465
        %v486 = vsub.f32 0.0, %v466
        %v487 = vsub.f32 0.0, %v467
        %v488 = vsub.f32 0.0, %v468
        %v489 = vsub.f32 0.0, %v469
        %v490 = vsub.f32 0.0, %v470
        %v491 = vsub.f32 0.0, %v471
        %v492 = vsub.f32 0.0, %v472
        %v493 = vsub.f32 0.0, %v473
        %v494 = vsub.f32 0.0, %v474
        %v495 = vsub.f32 0.0, %v475
        %v496 = vsub.f32 0.0, %v476
        %v497 = vsub.f32 0.0, %v477
        %v498 = vsub.f32 0.0, %v478
        %v499 = vmul.f32 %v479, 1.442695
        %v500 = vpow.pop %v499
        %v501 = vmul.f32 %v480, 1.442695
        %v502 = vpow.pop %v501
        %v503 = vmul.f32 %v481, 1.442695
        %v504 = vpow.pop %v503
        %v505 = vmul.f32 %v482, 1.442695
        %v506 = vpow.pop %v505
        %v507 = vmul.f32 %v483, 1.442695
        %v508 = vpow.pop %v507
        %v509 = vmul.f32 %v484, 1.442695
        %v510 = vpow.pop %v509
        %v511 = vmul.f32 %v485, 1.442695
        %v512 = vpow.pop %v511
        %v513 = vmul.f32 %v486, 1.442695
        %v514 = vpow.pop %v513
        %v515 = vmul.f32 %v487, 1.442695
        %v516 = vpow.pop %v515
        %v517 = vmul.f32 %v488, 1.442695
        %v518 = vpow.pop %v517
        %v519 = vmul.f32 %v489, 1.442695
        %v520 = vpow.pop %v519
        %v521 = vmul.f32 %v490, 1.442695
        %v522 = vpow.pop %v521
        %v523 = vmul.f32 %v491, 1.442695
        %v524 = vpow.pop %v523
        %v525 = vmul.f32 %v492, 1.442695
        %v526 = vpow.pop %v525
        %v527 = vmul.f32 %v493, 1.442695
        %v528 = vpow.pop %v527
        %v529 = vmul.f32 %v494, 1.442695
        %v530 = vpow.pop %v529
        %v531 = vmul.f32 %v495, 1.442695
        %v532 = vpow.pop %v531
        %v533 = vmul.f32 %v496, 1.442695
        %v534 = vpow.pop %v533
        %v535 = vmul.f32 %v497, 1.442695
        %v536 = vpow.pop %v535
        %v537 = vmul.f32 %v498, 1.442695
        %v538 = vpow.pop %v537
        %v539 = vadd.f32 %v500, 1.0
        %v540 = vadd.f32 %v502, 1.0
        %v541 = vadd.f32 %v504, 1.0
        %v542 = vadd.f32 %v506, 1.0
        %v543 = vadd.f32 %v508, 1.0
        %v544 = vadd.f32 %v510, 1.0
        %v545 = vadd.f32 %v512, 1.0
        %v546 = vadd.f32 %v514, 1.0
        %v547 = vadd.f32 %v516, 1.0
        %v548 = vadd.f32 %v518, 1.0
        %v549 = vadd.f32 %v520, 1.0
        %v550 = vadd.f32 %v522, 1.0
        %v551 = vadd.f32 %v524, 1.0
        %v552 = vadd.f32 %v526, 1.0
        %v553 = vadd.f32 %v528, 1.0
        %v554 = vadd.f32 %v530, 1.0
        %v555 = vadd.f32 %v532, 1.0
        %v556 = vadd.f32 %v534, 1.0
        %v557 = vadd.f32 %v536, 1.0
        %v558 = vadd.f32 %v538, 1.0
        %v559 = vrcp.pop %v539
        %v560 = vrcp.pop %v540
        %v561 = vrcp.pop %v541
        %v562 = vrcp.pop %v542
        %v563 = vrcp.pop %v543
        %v564 = vrcp.pop %v544
        %v565 = vrcp.pop %v545
        %v566 = vrcp.pop %v546
        %v567 = vrcp.pop %v547
        %v568 = vrcp.pop %v548
        %v569 = vrcp.pop %v549
        %v570 = vrcp.pop %v550
        %v571 = vrcp.pop %v551
        %v572 = vrcp.pop %v552
        %v573 = vrcp.pop %v553
        %v574 = vrcp.pop %v554
        %v575 = vrcp.pop %v555
        %v576 = vrcp.pop %v556
        %v577 = vrcp.pop %v557
        %v578 = vrcp.pop %v558
        %vm579 = vcmp.ge.f32.partialorder %v339, 0.0
        %vm580 = vcmp.ge.f32.partialorder %v340, 0.0
        %vm581 = vcmp.ge.f32.partialorder %v341, 0.0
        %vm582 = vcmp.ge.f32.partialorder %v342, 0.0
        %vm583 = vcmp.ge.f32.partialorder %v343, 0.0
        %vm584 = vcmp.ge.f32.partialorder %v344, 0.0
        %vm585 = vcmp.ge.f32.partialorder %v345, 0.0
        %vm586 = vcmp.ge.f32.partialorder %v346, 0.0
        %vm587 = vcmp.ge.f32.partialorder %v347, 0.0
        %vm588 = vcmp.ge.f32.partialorder %v348, 0.0
        %vm589 = vcmp.ge.f32.partialorder %v349, 0.0
        %vm590 = vcmp.ge.f32.partialorder %v350, 0.0
        %vm591 = vcmp.ge.f32.partialorder %v351, 0.0
        %vm592 = vcmp.ge.f32.partialorder %v352, 0.0
        %vm593 = vcmp.ge.f32.partialorder %v353, 0.0
        %vm594 = vcmp.ge.f32.partialorder %v354, 0.0
        %vm595 = vcmp.ge.f32.partialorder %v355, 0.0
        %vm596 = vcmp.ge.f32.partialorder %v356, 0.0
        %vm597 = vcmp.ge.f32.partialorder %v357, 0.0
        %vm598 = vcmp.ge.f32.partialorder %v358, 0.0
        %v599 = vmul.f32 %v500, %v559
        %v600 = vmul.f32 %v502, %v560
        %v601 = vmul.f32 %v504, %v561
        %v602 = vmul.f32 %v506, %v562
        %v603 = vmul.f32 %v508, %v563
        %v604 = vmul.f32 %v510, %v564
        %v605 = vmul.f32 %v512, %v565
        %v606 = vmul.f32 %v514, %v566
        %v607 = vmul.f32 %v516, %v567
        %v608 = vmul.f32 %v518, %v568
        %v609 = vmul.f32 %v520, %v569
        %v610 = vmul.f32 %v522, %v570
        %v611 = vmul.f32 %v524, %v571
        %v612 = vmul.f32 %v526, %v572
        %v613 = vmul.f32 %v528, %v573
        %v614 = vmul.f32 %v530, %v574
        %v615 = vmul.f32 %v532, %v575
        %v616 = vmul.f32 %v534, %v576
        %v617 = vmul.f32 %v536, %v577
        %v618 = vmul.f32 %v538, %v578
        %v619 = vsel %vm579, %v559, %v599
        %v620 = vsel %vm580, %v560, %v600
        %v621 = vsel %vm581, %v561, %v601
        %v622 = vsel %vm582, %v562, %v602
        %v623 = vsel %vm583, %v563, %v603
        %v624 = vsel %vm584, %v564, %v604
        %v625 = vsel %vm585, %v565, %v605
        %v626 = vsel %vm586, %v566, %v606
        %v627 = vsel %vm587, %v567, %v607
        %v628 = vsel %vm588, %v568, %v608
        %v629 = vsel %vm589, %v569, %v609
        %v630 = vsel %vm590, %v570, %v610
        %v631 = vsel %vm591, %v571, %v611
        %v632 = vsel %vm592, %v572, %v612
        %v633 = vsel %vm593, %v573, %v613
        %v634 = vsel %vm594, %v574, %v614
        %v635 = vsel %vm595, %v575, %v615
        %v636 = vsel %vm596, %v576, %v616
        %v637 = vsel %vm597, %v577, %v617
        %v638 = vsel %vm598, %v578, %v618
        %v639 = vmax.f32 %v619, 1e-06
        %v640 = vmax.f32 %v620, 1e-06
        %v641 = vmax.f32 %v621, 1e-06
        %v642 = vmax.f32 %v622, 1e-06
        %v643 = vmax.f32 %v623, 1e-06
        %v644 = vmax.f32 %v624, 1e-06
        %v645 = vmax.f32 %v625, 1e-06
        %v646 = vmax.f32 %v626, 1e-06
        %v647 = vmax.f32 %v627, 1e-06
        %v648 = vmax.f32 %v628, 1e-06
        %v649 = vmax.f32 %v629, 1e-06
        %v650 = vmax.f32 %v630, 1e-06
        %v651 = vmax.f32 %v631, 1e-06
        %v652 = vmax.f32 %v632, 1e-06
        %v653 = vmax.f32 %v633, 1e-06
        %v654 = vmax.f32 %v634, 1e-06
        %v655 = vmax.f32 %v635, 1e-06
        %v656 = vmax.f32 %v636, 1e-06
        %v657 = vmax.f32 %v637, 1e-06
        %v658 = vmax.f32 %v638, 1e-06
        %v659 = vmin.f32 %v639, 0.999999
        %v660 = vmin.f32 %v640, 0.999999
        %v661 = vmin.f32 %v641, 0.999999
        %v662 = vmin.f32 %v642, 0.999999
        %v663 = vmin.f32 %v643, 0.999999
        %v664 = vmin.f32 %v644, 0.999999
        %v665 = vmin.f32 %v645, 0.999999
        %v666 = vmin.f32 %v646, 0.999999
        %v667 = vmin.f32 %v647, 0.999999
        %v668 = vmin.f32 %v648, 0.999999
        %v669 = vmin.f32 %v649, 0.999999
        %v670 = vmin.f32 %v650, 0.999999
        %v671 = vmin.f32 %v651, 0.999999
        %v672 = vmin.f32 %v652, 0.999999
        %v673 = vmin.f32 %v653, 0.999999
        %v674 = vmin.f32 %v654, 0.999999
        %v675 = vmin.f32 %v655, 0.999999
        %v676 = vmin.f32 %v656, 0.999999
        %v677 = vmin.f32 %v657, 0.999999
        %v678 = vmin.f32 %v658, 0.999999
        %v679 = vsub.f32 %v439, 1.0
        %v680 = vsub.f32 %v440, 1.0
        %v681 = vsub.f32 %v441, 1.0
        %v682 = vsub.f32 %v442, 1.0
        %v683 = vsub.f32 %v443, 1.0
        %v684 = vsub.f32 %v444, 1.0
        %v685 = vsub.f32 %v445, 1.0
        %v686 = vsub.f32 %v446, 1.0
        %v687 = vsub.f32 %v447, 1.0
        %v688 = vsub.f32 %v448, 1.0
        %v689 = vsub.f32 %v449, 1.0
        %v690 = vsub.f32 %v450, 1.0
        %v691 = vsub.f32 %v451, 1.0
        %v692 = vsub.f32 %v452, 1.0
        %v693 = vsub.f32 %v453, 1.0
        %v694 = vsub.f32 %v454, 1.0
        %v695 = vsub.f32 %v455, 1.0
        %v696 = vsub.f32 %v456, 1.0
        %v697 = vsub.f32 %v457, 1.0
        %v698 = vsub.f32 %v458, 1.0
        %v699 = vmul.f32 %v679, %v399
        %v700 = vmul.f32 %v680, %v400
        %v701 = vmul.f32 %v681, %v401
        %v702 = vmul.f32 %v682, %v402
        %v703 = vmul.f32 %v683, %v403
        %v704 = vmul.f32 %v684, %v404
        %v705 = vmul.f32 %v685, %v405
        %v706 = vmul.f32 %v686, %v406
        %v707 = vmul.f32 %v687, %v407
        %v708 = vmul.f32 %v688, %v408
        %v709 = vmul.f32 %v689, %v409
        %v710 = vmul.f32 %v690, %v410
        %v711 = vmul.f32 %v691, %v411
        %v712 = vmul.f32 %v692, %v412
        %v713 = vmul.f32 %v693, %v413
        %v714 = vmul.f32 %v694, %v414
        %v715 = vmul.f32 %v695, %v415
        %v716 = vmul.f32 %v696, %v416
        %v717 = vmul.f32 %v697, %v417
        %v718 = vmul.f32 %v698, %v418
        %v719 = vadd.f32 %v699, 1.0
        %v720 = vadd.f32 %v700, 1.0
        %v721 = vadd.f32 %v701, 1.0
        %v722 = vadd.f32 %v702, 1.0
        %v723 = vadd.f32 %v703, 1.0
        %v724 = vadd.f32 %v704, 1.0
        %v725 = vadd.f32 %v705, 1.0
        %v726 = vadd.f32 %v706, 1.0
        %v727 = vadd.f32 %v707, 1.0
        %v728 = vadd.f32 %v708, 1.0
        %v729 = vadd.f32 %v709, 1.0
        %v730 = vadd.f32 %v710, 1.0
        %v731 = vadd.f32 %v711, 1.0
        %v732 = vadd.f32 %v712, 1.0
        %v733 = vadd.f32 %v713, 1.0
        %v734 = vadd.f32 %v714, 1.0
        %v735 = vadd.f32 %v715, 1.0
        %v736 = vadd.f32 %v716, 1.0
        %v737 = vadd.f32 %v717, 1.0
        %v738 = vadd.f32 %v718, 1.0
        %v739 = vsub.f32 1.0, %v399
        %v740 = vsub.f32 1.0, %v400
        %v741 = vsub.f32 1.0, %v401
        %v742 = vsub.f32 1.0, %v402
        %v743 = vsub.f32 1.0, %v403
        %v744 = vsub.f32 1.0, %v404
        %v745 = vsub.f32 1.0, %v405
        %v746 = vsub.f32 1.0, %v406
        %v747 = vsub.f32 1.0, %v407
        %v748 = vsub.f32 1.0, %v408
        %v749 = vsub.f32 1.0, %v409
        %v750 = vsub.f32 1.0, %v410
        %v751 = vsub.f32 1.0, %v411
        %v752 = vsub.f32 1.0, %v412
        %v753 = vsub.f32 1.0, %v413
        %v754 = vsub.f32 1.0, %v414
        %v755 = vsub.f32 1.0, %v415
        %v756 = vsub.f32 1.0, %v416
        %v757 = vsub.f32 1.0, %v417
        %v758 = vsub.f32 1.0, %v418
        %v759 = vmul.f32 %v739, %v339
        %v760 = vmul.f32 %v740, %v340
        %v761 = vmul.f32 %v741, %v341
        %v762 = vmul.f32 %v742, %v342
        %v763 = vmul.f32 %v743, %v343
        %v764 = vmul.f32 %v744, %v344
        %v765 = vmul.f32 %v745, %v345
        %v766 = vmul.f32 %v746, %v346
        %v767 = vmul.f32 %v747, %v347
        %v768 = vmul.f32 %v748, %v348
        %v769 = vmul.f32 %v749, %v349
        %v770 = vmul.f32 %v750, %v350
        %v771 = vmul.f32 %v751, %v351
        %v772 = vmul.f32 %v752, %v352
        %v773 = vmul.f32 %v753, %v353
        %v774 = vmul.f32 %v754, %v354
        %v775 = vmul.f32 %v755, %v355
        %v776 = vmul.f32 %v756, %v356
        %v777 = vmul.f32 %v757, %v357
        %v778 = vmul.f32 %v758, %v358
        %v779 = vadd.f32 %v500, 1.0
        %v780 = vlog2.pop %v779
        %v781 = vmul.f32 %v780, 0.6931472
        %v782 = vmul.f32 -0.5, %v500
        %v783 = vadd.f32 %v782, 1.0
        %v784 = vmul.f32 %v783, %v500
        %v785 = vand.u32 2147483647, %v500
        %vm786 = vcmp.lt.f32.partialorder %v785, 0.0004427343
        %v787 = vsel %vm786, %v784, %v781
        %v788 = vadd.f32 %v502, 1.0
        %v789 = vlog2.pop %v788
        %v790 = vmul.f32 %v789, 0.6931472
        %v791 = vmul.f32 -0.5, %v502
        %v792 = vadd.f32 %v791, 1.0
        %v793 = vmul.f32 %v792, %v502
        %v794 = vand.u32 2147483647, %v502
        %vm795 = vcmp.lt.f32.partialorder %v794, 0.0004427343
        %v796 = vsel %vm795, %v793, %v790
        %v797 = vadd.f32 %v504, 1.0
        %v798 = vlog2.pop %v797
        %v799 = vmul.f32 %v798, 0.6931472
        %v800 = vmul.f32 -0.5, %v504
        %v801 = vadd.f32 %v800, 1.0
        %v802 = vmul.f32 %v801, %v504
        %v803 = vand.u32 2147483647, %v504
        %vm804 = vcmp.lt.f32.partialorder %v803, 0.0004427343
        %v805 = vsel %vm804, %v802, %v799
        %v806 = vadd.f32 %v506, 1.0
        %v807 = vlog2.pop %v806
        %v808 = vmul.f32 %v807, 0.6931472
        %v809 = vmul.f32 -0.5, %v506
        %v810 = vadd.f32 %v809, 1.0
        %v811 = vmul.f32 %v810, %v506
        %v812 = vand.u32 2147483647, %v506
        %vm813 = vcmp.lt.f32.partialorder %v812, 0.0004427343
        %v814 = vsel %vm813, %v811, %v808
        %v815 = vadd.f32 %v508, 1.0
        %v816 = vlog2.pop %v815
        %v817 = vmul.f32 %v816, 0.6931472
        %v818 = vmul.f32 -0.5, %v508
        %v819 = vadd.f32 %v818, 1.0
        %v820 = vmul.f32 %v819, %v508
        %v821 = vand.u32 2147483647, %v508
        %vm822 = vcmp.lt.f32.partialorder %v821, 0.0004427343
        %v823 = vsel %vm822, %v820, %v817
        %v824 = vadd.f32 %v510, 1.0
        %v825 = vlog2.pop %v824
        %v826 = vmul.f32 %v825, 0.6931472
        %v827 = vmul.f32 -0.5, %v510
        %v828 = vadd.f32 %v827, 1.0
        %v829 = vmul.f32 %v828, %v510
        %v830 = vand.u32 2147483647, %v510
        %vm831 = vcmp.lt.f32.partialorder %v830, 0.0004427343
        %v832 = vsel %vm831, %v829, %v826
        %v833 = vadd.f32 %v512, 1.0
        %v834 = vlog2.pop %v833
        %v835 = vmul.f32 %v834, 0.6931472
        %v836 = vmul.f32 -0.5, %v512
        %v837 = vadd.f32 %v836, 1.0
        %v838 = vmul.f32 %v837, %v512
        %v839 = vand.u32 2147483647, %v512
        %vm840 = vcmp.lt.f32.partialorder %v839, 0.0004427343
        %v841 = vsel %vm840, %v838, %v835
        %v842 = vadd.f32 %v514, 1.0
        %v843 = vlog2.pop %v842
        %v844 = vmul.f32 %v843, 0.6931472
        %v845 = vmul.f32 -0.5, %v514
        %v846 = vadd.f32 %v845, 1.0
        %v847 = vmul.f32 %v846, %v514
        %v848 = vand.u32 2147483647, %v514
        %vm849 = vcmp.lt.f32.partialorder %v848, 0.0004427343
        %v850 = vsel %vm849, %v847, %v844
        %v851 = vadd.f32 %v516, 1.0
        %v852 = vlog2.pop %v851
        %v853 = vmul.f32 %v852, 0.6931472
        %v854 = vmul.f32 -0.5, %v516
        %v855 = vadd.f32 %v854, 1.0
        %v856 = vmul.f32 %v855, %v516
        %v857 = vand.u32 2147483647, %v516
        %vm858 = vcmp.lt.f32.partialorder %v857, 0.0004427343
        %v859 = vsel %vm858, %v856, %v853
        %v860 = vadd.f32 %v518, 1.0
        %v861 = vlog2.pop %v860
        %v862 = vmul.f32 %v861, 0.6931472
        %v863 = vmul.f32 -0.5, %v518
        %v864 = vadd.f32 %v863, 1.0
        %v865 = vmul.f32 %v864, %v518
        %v866 = vand.u32 2147483647, %v518
        %vm867 = vcmp.lt.f32.partialorder %v866, 0.0004427343
        %v868 = vsel %vm867, %v865, %v862
        %v869 = vadd.f32 %v520, 1.0
        %v870 = vlog2.pop %v869
        %v871 = vmul.f32 %v870, 0.6931472
        %v872 = vmul.f32 -0.5, %v520
        %v873 = vadd.f32 %v872, 1.0
        %v874 = vmul.f32 %v873, %v520
        %v875 = vand.u32 2147483647, %v520
        %vm876 = vcmp.lt.f32.partialorder %v875, 0.0004427343
        %v877 = vsel %vm876, %v874, %v871
        %v878 = vadd.f32 %v522, 1.0
        %v879 = vlog2.pop %v878
        %v880 = vmul.f32 %v879, 0.6931472
        %v881 = vmul.f32 -0.5, %v522
        %v882 = vadd.f32 %v881, 1.0
        %v883 = vmul.f32 %v882, %v522
        %v884 = vand.u32 2147483647, %v522
        %vm885 = vcmp.lt.f32.partialorder %v884, 0.0004427343
        %v886 = vsel %vm885, %v883, %v880
        %v887 = vadd.f32 %v524, 1.0
        %v888 = vlog2.pop %v887
        %v889 = vmul.f32 %v888, 0.6931472
        %v890 = vmul.f32 -0.5, %v524
        %v891 = vadd.f32 %v890, 1.0
        %v892 = vmul.f32 %v891, %v524
        %v893 = vand.u32 2147483647, %v524
        %vm894 = vcmp.lt.f32.partialorder %v893, 0.0004427343
        %v895 = vsel %vm894, %v892, %v889
        %v896 = vadd.f32 %v526, 1.0
        %v897 = vlog2.pop %v896
        %v898 = vmul.f32 %v897, 0.6931472
        %v899 = vmul.f32 -0.5, %v526
        %v900 = vadd.f32 %v899, 1.0
        %v901 = vmul.f32 %v900, %v526
        %v902 = vand.u32 2147483647, %v526
        %vm903 = vcmp.lt.f32.partialorder %v902, 0.0004427343
        %v904 = vsel %vm903, %v901, %v898
        %v905 = vadd.f32 %v528, 1.0
        %v906 = vlog2.pop %v905
        %v907 = vmul.f32 %v906, 0.6931472
        %v908 = vmul.f32 -0.5, %v528
        %v909 = vadd.f32 %v908, 1.0
        %v910 = vmul.f32 %v909, %v528
        %v911 = vand.u32 2147483647, %v528
        %vm912 = vcmp.lt.f32.partialorder %v911, 0.0004427343
        %v913 = vsel %vm912, %v910, %v907
        %v914 = vadd.f32 %v530, 1.0
        %v915 = vlog2.pop %v914
        %v916 = vmul.f32 %v915, 0.6931472
        %v917 = vmul.f32 -0.5, %v530
        %v918 = vadd.f32 %v917, 1.0
        %v919 = vmul.f32 %v918, %v530
        %v920 = vand.u32 2147483647, %v530
        %vm921 = vcmp.lt.f32.partialorder %v920, 0.0004427343
        %v922 = vsel %vm921, %v919, %v916
        %v923 = vadd.f32 %v532, 1.0
        %v924 = vlog2.pop %v923
        %v925 = vmul.f32 %v924, 0.6931472
        %v926 = vmul.f32 -0.5, %v532
        %v927 = vadd.f32 %v926, 1.0
        %v928 = vmul.f32 %v927, %v532
        %v929 = vand.u32 2147483647, %v532
        %vm930 = vcmp.lt.f32.partialorder %v929, 0.0004427343
        %v931 = vsel %vm930, %v928, %v925
        %v932 = vadd.f32 %v534, 1.0
        %v933 = vlog2.pop %v932
        %v934 = vmul.f32 %v933, 0.6931472
        %v935 = vmul.f32 -0.5, %v534
        %v936 = vadd.f32 %v935, 1.0
        %v937 = vmul.f32 %v936, %v534
        %v938 = vand.u32 2147483647, %v534
        %vm939 = vcmp.lt.f32.partialorder %v938, 0.0004427343
        %v940 = vsel %vm939, %v937, %v934
        %v941 = vadd.f32 %v536, 1.0
        %v942 = vlog2.pop %v941
        %v943 = vmul.f32 %v942, 0.6931472
        %v944 = vmul.f32 -0.5, %v536
        %v945 = vadd.f32 %v944, 1.0
        %v946 = vmul.f32 %v945, %v536
        %v947 = vand.u32 2147483647, %v536
        %vm948 = vcmp.lt.f32.partialorder %v947, 0.0004427343
        %v949 = vsel %vm948, %v946, %v943
        %v950 = vadd.f32 %v538, 1.0
        %v951 = vlog2.pop %v950
        %v952 = vmul.f32 %v951, 0.6931472
        %v953 = vmul.f32 -0.5, %v538
        %v954 = vadd.f32 %v953, 1.0
        %v955 = vmul.f32 %v954, %v538
        %v956 = vand.u32 2147483647, %v538
        %vm957 = vcmp.lt.f32.partialorder %v956, 0.0004427343
        %v958 = vsel %vm957, %v955, %v952
        %v959 = vsub.f32 0.0, %v339
        %v960 = vsub.f32 0.0, %v340
        %v961 = vsub.f32 0.0, %v341
        %v962 = vsub.f32 0.0, %v342
        %v963 = vsub.f32 0.0, %v343
        %v964 = vsub.f32 0.0, %v344
        %v965 = vsub.f32 0.0, %v345
        %v966 = vsub.f32 0.0, %v346
        %v967 = vsub.f32 0.0, %v347
        %v968 = vsub.f32 0.0, %v348
        %v969 = vsub.f32 0.0, %v349
        %v970 = vsub.f32 0.0, %v350
        %v971 = vsub.f32 0.0, %v351
        %v972 = vsub.f32 0.0, %v352
        %v973 = vsub.f32 0.0, %v353
        %v974 = vsub.f32 0.0, %v354
        %v975 = vsub.f32 0.0, %v355
        %v976 = vsub.f32 0.0, %v356
        %v977 = vsub.f32 0.0, %v357
        %v978 = vsub.f32 0.0, %v358
        %v979 = vmax.f32 %v959, 0.0
        %v980 = vmax.f32 %v960, 0.0
        %v981 = vmax.f32 %v961, 0.0
        %v982 = vmax.f32 %v962, 0.0
        %v983 = vmax.f32 %v963, 0.0
        %v984 = vmax.f32 %v964, 0.0
        %v985 = vmax.f32 %v965, 0.0
        %v986 = vmax.f32 %v966, 0.0
        %v987 = vmax.f32 %v967, 0.0
        %v988 = vmax.f32 %v968, 0.0
        %v989 = vmax.f32 %v969, 0.0
        %v990 = vmax.f32 %v970, 0.0
        %v991 = vmax.f32 %v971, 0.0
        %v992 = vmax.f32 %v972, 0.0
        %v993 = vmax.f32 %v973, 0.0
        %v994 = vmax.f32 %v974, 0.0
        %v995 = vmax.f32 %v975, 0.0
        %v996 = vmax.f32 %v976, 0.0
        %v997 = vmax.f32 %v977, 0.0
        %v998 = vmax.f32 %v978, 0.0
        %v999 = vadd.f32 %v787, %v979
        %v1000 = vadd.f32 %v796, %v980
        %v1001 = vadd.f32 %v805, %v981
        %v1002 = vadd.f32 %v814, %v982
        %v1003 = vadd.f32 %v823, %v983
        %v1004 = vadd.f32 %v832, %v984
        %v1005 = vadd.f32 %v841, %v985
        %v1006 = vadd.f32 %v850, %v986
        %v1007 = vadd.f32 %v859, %v987
        %v1008 = vadd.f32 %v868, %v988
        %v1009 = vadd.f32 %v877, %v989
        %v1010 = vadd.f32 %v886, %v990
        %v1011 = vadd.f32 %v895, %v991
        %v1012 = vadd.f32 %v904, %v992
        %v1013 = vadd.f32 %v913, %v993
        %v1014 = vadd.f32 %v922, %v994
        %v1015 = vadd.f32 %v931, %v995
        %v1016 = vadd.f32 %v940, %v996
        %v1017 = vadd.f32 %v949, %v997
        %v1018 = vadd.f32 %v958, %v998
        %v1019 = vmul.f32 %v719, %v999
        %v1020 = vmul.f32 %v720, %v1000
        %v1021 = vmul.f32 %v721, %v1001
        %v1022 = vmul.f32 %v722, %v1002
        %v1023 = vmul.f32 %v723, %v1003
        %v1024 = vmul.f32 %v724, %v1004
        %v1025 = vmul.f32 %v725, %v1005
        %v1026 = vmul.f32 %v726, %v1006
        %v1027 = vmul.f32 %v727, %v1007
        %v1028 = vmul.f32 %v728, %v1008
        %v1029 = vmul.f32 %v729, %v1009
        %v1030 = vmul.f32 %v730, %v1010
        %v1031 = vmul.f32 %v731, %v1011
        %v1032 = vmul.f32 %v732, %v1012
        %v1033 = vmul.f32 %v733, %v1013
        %v1034 = vmul.f32 %v734, %v1014
        %v1035 = vmul.f32 %v735, %v1015
        %v1036 = vmul.f32 %v736, %v1016
        %v1037 = vmul.f32 %v737, %v1017
        %v1038 = vmul.f32 %v738, %v1018
        %v1039 = vadd.f32 %v759, %v1019
        %v1040 = vadd.f32 %v760, %v1020
        %v1041 = vadd.f32 %v761, %v1021
        %v1042 = vadd.f32 %v762, %v1022
        %v1043 = vadd.f32 %v763, %v1023
        %v1044 = vadd.f32 %v764, %v1024
        %v1045 = vadd.f32 %v765, %v1025
        %v1046 = vadd.f32 %v766, %v1026
        %v1047 = vadd.f32 %v767, %v1027
        %v1048 = vadd.f32 %v768, %v1028
        %v1049 = vadd.f32 %v769, %v1029
        %v1050 = vadd.f32 %v770, %v1030
        %v1051 = vadd.f32 %v771, %v1031
        %v1052 = vadd.f32 %v772, %v1032
        %v1053 = vadd.f32 %v773, %v1033
        %v1054 = vadd.f32 %v774, %v1034
        %v1055 = vadd.f32 %v775, %v1035
        %v1056 = vadd.f32 %v776, %v1036
        %v1057 = vadd.f32 %v777, %v1037
        %v1058 = vadd.f32 %v778, %v1038
        %v1059 = vmul.f32 %v399, %v659
        %v1060 = vmul.f32 %v400, %v660
        %v1061 = vmul.f32 %v401, %v661
        %v1062 = vmul.f32 %v402, %v662
        %v1063 = vmul.f32 %v403, %v663
        %v1064 = vmul.f32 %v404, %v664
        %v1065 = vmul.f32 %v405, %v665
        %v1066 = vmul.f32 %v406, %v666
        %v1067 = vmul.f32 %v407, %v667
        %v1068 = vmul.f32 %v408, %v668
        %v1069 = vmul.f32 %v409, %v669
        %v1070 = vmul.f32 %v410, %v670
        %v1071 = vmul.f32 %v411, %v671
        %v1072 = vmul.f32 %v412, %v672
        %v1073 = vmul.f32 %v413, %v673
        %v1074 = vmul.f32 %v414, %v674
        %v1075 = vmul.f32 %v415, %v675
        %v1076 = vmul.f32 %v416, %v676
        %v1077 = vmul.f32 %v417, %v677
        %v1078 = vmul.f32 %v418, %v678
        %v1079 = vsub.f32 1.0, %v659
        %v1080 = vsub.f32 1.0, %v660
        %v1081 = vsub.f32 1.0, %v661
        %v1082 = vsub.f32 1.0, %v662
        %v1083 = vsub.f32 1.0, %v663
        %v1084 = vsub.f32 1.0, %v664
        %v1085 = vsub.f32 1.0, %v665
        %v1086 = vsub.f32 1.0, %v666
        %v1087 = vsub.f32 1.0, %v667
        %v1088 = vsub.f32 1.0, %v668
        %v1089 = vsub.f32 1.0, %v669
        %v1090 = vsub.f32 1.0, %v670
        %v1091 = vsub.f32 1.0, %v671
        %v1092 = vsub.f32 1.0, %v672
        %v1093 = vsub.f32 1.0, %v673
        %v1094 = vsub.f32 1.0, %v674
        %v1095 = vsub.f32 1.0, %v675
        %v1096 = vsub.f32 1.0, %v676
        %v1097 = vsub.f32 1.0, %v677
        %v1098 = vsub.f32 1.0, %v678
        %v1099 = vmul.f32 %v739, %v1079
        %v1100 = vmul.f32 %v740, %v1080
        %v1101 = vmul.f32 %v741, %v1081
        %v1102 = vmul.f32 %v742, %v1082
        %v1103 = vmul.f32 %v743, %v1083
        %v1104 = vmul.f32 %v744, %v1084
        %v1105 = vmul.f32 %v745, %v1085
        %v1106 = vmul.f32 %v746, %v1086
        %v1107 = vmul.f32 %v747, %v1087
        %v1108 = vmul.f32 %v748, %v1088
        %v1109 = vmul.f32 %v749, %v1089
        %v1110 = vmul.f32 %v750, %v1090
        %v1111 = vmul.f32 %v751, %v1091
        %v1112 = vmul.f32 %v752, %v1092
        %v1113 = vmul.f32 %v753, %v1093
        %v1114 = vmul.f32 %v754, %v1094
        %v1115 = vmul.f32 %v755, %v1095
        %v1116 = vmul.f32 %v756, %v1096
        %v1117 = vmul.f32 %v757, %v1097
        %v1118 = vmul.f32 %v758, %v1098
        %v1119 = vadd.f32 %v1059, %v1099
        %v1120 = vadd.f32 %v1060, %v1100
        %v1121 = vadd.f32 %v1061, %v1101
        %v1122 = vadd.f32 %v1062, %v1102
        %v1123 = vadd.f32 %v1063, %v1103
        %v1124 = vadd.f32 %v1064, %v1104
        %v1125 = vadd.f32 %v1065, %v1105
        %v1126 = vadd.f32 %v1066, %v1106
        %v1127 = vadd.f32 %v1067, %v1107
        %v1128 = vadd.f32 %v1068, %v1108
        %v1129 = vadd.f32 %v1069, %v1109
        %v1130 = vadd.f32 %v1070, %v1110
        %v1131 = vadd.f32 %v1071, %v1111
        %v1132 = vadd.f32 %v1072, %v1112
        %v1133 = vadd.f32 %v1073, %v1113
        %v1134 = vadd.f32 %v1074, %v1114
        %v1135 = vadd.f32 %v1075, %v1115
        %v1136 = vadd.f32 %v1076, %v1116
        %v1137 = vadd.f32 %v1077, %v1117
        %v1138 = vadd.f32 %v1078, %v1118
        %v1139 = vmax.f32 %v1119, 1e-06
        %v1140 = vmax.f32 %v1120, 1e-06
        %v1141 = vmax.f32 %v1121, 1e-06
        %v1142 = vmax.f32 %v1122, 1e-06
        %v1143 = vmax.f32 %v1123, 1e-06
        %v1144 = vmax.f32 %v1124, 1e-06
        %v1145 = vmax.f32 %v1125, 1e-06
        %v1146 = vmax.f32 %v1126, 1e-06
        %v1147 = vmax.f32 %v1127, 1e-06
        %v1148 = vmax.f32 %v1128, 1e-06
        %v1149 = vmax.f32 %v1129, 1e-06
        %v1150 = vmax.f32 %v1130, 1e-06
        %v1151 = vmax.f32 %v1131, 1e-06
        %v1152 = vmax.f32 %v1132, 1e-06
        %v1153 = vmax.f32 %v1133, 1e-06
        %v1154 = vmax.f32 %v1134, 1e-06
        %v1155 = vmax.f32 %v1135, 1e-06
        %v1156 = vmax.f32 %v1136, 1e-06
        %v1157 = vmax.f32 %v1137, 1e-06
        %v1158 = vmax.f32 %v1138, 1e-06
        %v1159 = vmin.f32 %v1139, 1.0
        %v1160 = vmin.f32 %v1140, 1.0
        %v1161 = vmin.f32 %v1141, 1.0
        %v1162 = vmin.f32 %v1142, 1.0
        %v1163 = vmin.f32 %v1143, 1.0
        %v1164 = vmin.f32 %v1144, 1.0
        %v1165 = vmin.f32 %v1145, 1.0
        %v1166 = vmin.f32 %v1146, 1.0
        %v1167 = vmin.f32 %v1147, 1.0
        %v1168 = vmin.f32 %v1148, 1.0
        %v1169 = vmin.f32 %v1149, 1.0
        %v1170 = vmin.f32 %v1150, 1.0
        %v1171 = vmin.f32 %v1151, 1.0
        %v1172 = vmin.f32 %v1152, 1.0
        %v1173 = vmin.f32 %v1153, 1.0
        %v1174 = vmin.f32 %v1154, 1.0
        %v1175 = vmin.f32 %v1155, 1.0
        %v1176 = vmin.f32 %v1156, 1.0
        %v1177 = vmin.f32 %v1157, 1.0
        %v1178 = vmin.f32 %v1158, 1.0
        %v1179 = vsub.f32 1.0, %v1159
        %v1180 = vsub.f32 1.0, %v1160
        %v1181 = vsub.f32 1.0, %v1161
        %v1182 = vsub.f32 1.0, %v1162
        %v1183 = vsub.f32 1.0, %v1163
        %v1184 = vsub.f32 1.0, %v1164
        %v1185 = vsub.f32 1.0, %v1165
        %v1186 = vsub.f32 1.0, %v1166
        %v1187 = vsub.f32 1.0, %v1167
        %v1188 = vsub.f32 1.0, %v1168
        %v1189 = vsub.f32 1.0, %v1169
        %v1190 = vsub.f32 1.0, %v1170
        %v1191 = vsub.f32 1.0, %v1171
        %v1192 = vsub.f32 1.0, %v1172
        %v1193 = vsub.f32 1.0, %v1173
        %v1194 = vsub.f32 1.0, %v1174
        %v1195 = vsub.f32 1.0, %v1175
        %v1196 = vsub.f32 1.0, %v1176
        %v1197 = vsub.f32 1.0, %v1177
        %v1198 = vsub.f32 1.0, %v1178
        %v1199 = vmul.f32 %v1179, %v1179
        %v1200 = vmul.f32 %v1180, %v1180
        %v1201 = vmul.f32 %v1181, %v1181
        %v1202 = vmul.f32 %v1182, %v1182
        %v1203 = vmul.f32 %v1183, %v1183
        %v1204 = vmul.f32 %v1184, %v1184
        %v1205 = vmul.f32 %v1185, %v1185
        %v1206 = vmul.f32 %v1186, %v1186
        %v1207 = vmul.f32 %v1187, %v1187
        %v1208 = vmul.f32 %v1188, %v1188
        %v1209 = vmul.f32 %v1189, %v1189
        %v1210 = vmul.f32 %v1190, %v1190
        %v1211 = vmul.f32 %v1191, %v1191
        %v1212 = vmul.f32 %v1192, %v1192
        %v1213 = vmul.f32 %v1193, %v1193
        %v1214 = vmul.f32 %v1194, %v1194
        %v1215 = vmul.f32 %v1195, %v1195
        %v1216 = vmul.f32 %v1196, %v1196
        %v1217 = vmul.f32 %v1197, %v1197
        %v1218 = vmul.f32 %v1198, %v1198
        %v1219 = vmul.f32 %v1199, %v1179
        %v1220 = vmul.f32 %v1200, %v1180
        %v1221 = vmul.f32 %v1201, %v1181
        %v1222 = vmul.f32 %v1202, %v1182
        %v1223 = vmul.f32 %v1203, %v1183
        %v1224 = vmul.f32 %v1204, %v1184
        %v1225 = vmul.f32 %v1205, %v1185
        %v1226 = vmul.f32 %v1206, %v1186
        %v1227 = vmul.f32 %v1207, %v1187
        %v1228 = vmul.f32 %v1208, %v1188
        %v1229 = vmul.f32 %v1209, %v1189
        %v1230 = vmul.f32 %v1210, %v1190
        %v1231 = vmul.f32 %v1211, %v1191
        %v1232 = vmul.f32 %v1212, %v1192
        %v1233 = vmul.f32 %v1213, %v1193
        %v1234 = vmul.f32 %v1214, %v1194
        %v1235 = vmul.f32 %v1215, %v1195
        %v1236 = vmul.f32 %v1216, %v1196
        %v1237 = vmul.f32 %v1217, %v1197
        %v1238 = vmul.f32 %v1218, %v1198
        %v1239 = vmul.f32 %v1219, 0.5
        %v1240 = vmul.f32 %v1220, 0.5
        %v1241 = vmul.f32 %v1221, 0.5
        %v1242 = vmul.f32 %v1222, 0.5
        %v1243 = vmul.f32 %v1223, 0.5
        %v1244 = vmul.f32 %v1224, 0.5
        %v1245 = vmul.f32 %v1225, 0.5
        %v1246 = vmul.f32 %v1226, 0.5
        %v1247 = vmul.f32 %v1227, 0.5
        %v1248 = vmul.f32 %v1228, 0.5
        %v1249 = vmul.f32 %v1229, 0.5
        %v1250 = vmul.f32 %v1230, 0.5
        %v1251 = vmul.f32 %v1231, 0.5
        %v1252 = vmul.f32 %v1232, 0.5
        %v1253 = vmul.f32 %v1233, 0.5
        %v1254 = vmul.f32 %v1234, 0.5
        %v1255 = vmul.f32 %v1235, 0.5
        %v1256 = vmul.f32 %v1236, 0.5
        %v1257 = vmul.f32 %v1237, 0.5
        %v1258 = vmul.f32 %v1238, 0.5
        %v1259 = vrsqrt.pop %v1179
        %v1260 = vmul.f32 %v1179, %v1259
        %vm1261 = vcmp.eq.f32.partialorder %v1179, inf
        %v1262 = vsel %vm1261, %v1179, %v1260
        %vm1263 = vcmp.eq.f32.partialorder %v1179, 0.0
        %v1264 = vand.u32 %v1179, 2147483648
        %v1265 = vsel %vm1263, %v1264, %v1262
        %v1266 = vrsqrt.pop %v1180
        %v1267 = vmul.f32 %v1180, %v1266
        %vm1268 = vcmp.eq.f32.partialorder %v1180, inf
        %v1269 = vsel %vm1268, %v1180, %v1267
        %vm1270 = vcmp.eq.f32.partialorder %v1180, 0.0
        %v1271 = vand.u32 %v1180, 2147483648
        %v1272 = vsel %vm1270, %v1271, %v1269
        %v1273 = vrsqrt.pop %v1181
        %v1274 = vmul.f32 %v1181, %v1273
        %vm1275 = vcmp.eq.f32.partialorder %v1181, inf
        %v1276 = vsel %vm1275, %v1181, %v1274
        %vm1277 = vcmp.eq.f32.partialorder %v1181, 0.0
        %v1278 = vand.u32 %v1181, 2147483648
        %v1279 = vsel %vm1277, %v1278, %v1276
        %v1280 = vrsqrt.pop %v1182
        %v1281 = vmul.f32 %v1182, %v1280
        %vm1282 = vcmp.eq.f32.partialorder %v1182, inf
        %v1283 = vsel %vm1282, %v1182, %v1281
        %vm1284 = vcmp.eq.f32.partialorder %v1182, 0.0
        %v1285 = vand.u32 %v1182, 2147483648
        %v1286 = vsel %vm1284, %v1285, %v1283
        %v1287 = vrsqrt.pop %v1183
        %v1288 = vmul.f32 %v1183, %v1287
        %vm1289 = vcmp.eq.f32.partialorder %v1183, inf
        %v1290 = vsel %vm1289, %v1183, %v1288
        %vm1291 = vcmp.eq.f32.partialorder %v1183, 0.0
        %v1292 = vand.u32 %v1183, 2147483648
        %v1293 = vsel %vm1291, %v1292, %v1290
        %v1294 = vrsqrt.pop %v1184
        %v1295 = vmul.f32 %v1184, %v1294
        %vm1296 = vcmp.eq.f32.partialorder %v1184, inf
        %v1297 = vsel %vm1296, %v1184, %v1295
        %vm1298 = vcmp.eq.f32.partialorder %v1184, 0.0
        %v1299 = vand.u32 %v1184, 2147483648
        %v1300 = vsel %vm1298, %v1299, %v1297
        %v1301 = vrsqrt.pop %v1185
        %v1302 = vmul.f32 %v1185, %v1301
        %vm1303 = vcmp.eq.f32.partialorder %v1185, inf
        %v1304 = vsel %vm1303, %v1185, %v1302
        %vm1305 = vcmp.eq.f32.partialorder %v1185, 0.0
        %v1306 = vand.u32 %v1185, 2147483648
        %v1307 = vsel %vm1305, %v1306, %v1304
        %v1308 = vrsqrt.pop %v1186
        %v1309 = vmul.f32 %v1186, %v1308
        %vm1310 = vcmp.eq.f32.partialorder %v1186, inf
        %v1311 = vsel %vm1310, %v1186, %v1309
        %vm1312 = vcmp.eq.f32.partialorder %v1186, 0.0
        %v1313 = vand.u32 %v1186, 2147483648
        %v1314 = vsel %vm1312, %v1313, %v1311
        %v1315 = vrsqrt.pop %v1187
        %v1316 = vmul.f32 %v1187, %v1315
        %vm1317 = vcmp.eq.f32.partialorder %v1187, inf
        %v1318 = vsel %vm1317, %v1187, %v1316
        %vm1319 = vcmp.eq.f32.partialorder %v1187, 0.0
        %v1320 = vand.u32 %v1187, 2147483648
        %v1321 = vsel %vm1319, %v1320, %v1318
        %v1322 = vrsqrt.pop %v1188
        %v1323 = vmul.f32 %v1188, %v1322
        %vm1324 = vcmp.eq.f32.partialorder %v1188, inf
        %v1325 = vsel %vm1324, %v1188, %v1323
        %vm1326 = vcmp.eq.f32.partialorder %v1188, 0.0
        %v1327 = vand.u32 %v1188, 2147483648
        %v1328 = vsel %vm1326, %v1327, %v1325
        %v1329 = vrsqrt.pop %v1189
        %v1330 = vmul.f32 %v1189, %v1329
        %vm1331 = vcmp.eq.f32.partialorder %v1189, inf
        %v1332 = vsel %vm1331, %v1189, %v1330
        %vm1333 = vcmp.eq.f32.partialorder %v1189, 0.0
        %v1334 = vand.u32 %v1189, 2147483648
        %v1335 = vsel %vm1333, %v1334, %v1332
        %v1336 = vrsqrt.pop %v1190
        %v1337 = vmul.f32 %v1190, %v1336
        %vm1338 = vcmp.eq.f32.partialorder %v1190, inf
        %v1339 = vsel %vm1338, %v1190, %v1337
        %vm1340 = vcmp.eq.f32.partialorder %v1190, 0.0
        %v1341 = vand.u32 %v1190, 2147483648
        %v1342 = vsel %vm1340, %v1341, %v1339
        %v1343 = vrsqrt.pop %v1191
        %v1344 = vmul.f32 %v1191, %v1343
        %vm1345 = vcmp.eq.f32.partialorder %v1191, inf
        %v1346 = vsel %vm1345, %v1191, %v1344
        %vm1347 = vcmp.eq.f32.partialorder %v1191, 0.0
        %v1348 = vand.u32 %v1191, 2147483648
        %v1349 = vsel %vm1347, %v1348, %v1346
        %v1350 = vrsqrt.pop %v1192
        %v1351 = vmul.f32 %v1192, %v1350
        %vm1352 = vcmp.eq.f32.partialorder %v1192, inf
        %v1353 = vsel %vm1352, %v1192, %v1351
        %vm1354 = vcmp.eq.f32.partialorder %v1192, 0.0
        %v1355 = vand.u32 %v1192, 2147483648
        %v1356 = vsel %vm1354, %v1355, %v1353
        %v1357 = vrsqrt.pop %v1193
        %v1358 = vmul.f32 %v1193, %v1357
        %vm1359 = vcmp.eq.f32.partialorder %v1193, inf
        %v1360 = vsel %vm1359, %v1193, %v1358
        %vm1361 = vcmp.eq.f32.partialorder %v1193, 0.0
        %v1362 = vand.u32 %v1193, 2147483648
        %v1363 = vsel %vm1361, %v1362, %v1360
        %v1364 = vrsqrt.pop %v1194
        %v1365 = vmul.f32 %v1194, %v1364
        %vm1366 = vcmp.eq.f32.partialorder %v1194, inf
        %v1367 = vsel %vm1366, %v1194, %v1365
        %vm1368 = vcmp.eq.f32.partialorder %v1194, 0.0
        %v1369 = vand.u32 %v1194, 2147483648
        %v1370 = vsel %vm1368, %v1369, %v1367
        %v1371 = vrsqrt.pop %v1195
        %v1372 = vmul.f32 %v1195, %v1371
        %vm1373 = vcmp.eq.f32.partialorder %v1195, inf
        %v1374 = vsel %vm1373, %v1195, %v1372
        %vm1375 = vcmp.eq.f32.partialorder %v1195, 0.0
        %v1376 = vand.u32 %v1195, 2147483648
        %v1377 = vsel %vm1375, %v1376, %v1374
        %v1378 = vrsqrt.pop %v1196
        %v1379 = vmul.f32 %v1196, %v1378
        %vm1380 = vcmp.eq.f32.partialorder %v1196, inf
        %v1381 = vsel %vm1380, %v1196, %v1379
        %vm1382 = vcmp.eq.f32.partialorder %v1196, 0.0
        %v1383 = vand.u32 %v1196, 2147483648
        %v1384 = vsel %vm1382, %v1383, %v1381
        %v1385 = vrsqrt.pop %v1197
        %v1386 = vmul.f32 %v1197, %v1385
        %vm1387 = vcmp.eq.f32.partialorder %v1197, inf
        %v1388 = vsel %vm1387, %v1197, %v1386
        %vm1389 = vcmp.eq.f32.partialorder %v1197, 0.0
        %v1390 = vand.u32 %v1197, 2147483648
        %v1391 = vsel %vm1389, %v1390, %v1388
        %v1392 = vrsqrt.pop %v1198
        %v1393 = vmul.f32 %v1198, %v1392
        %vm1394 = vcmp.eq.f32.partialorder %v1198, inf
        %v1395 = vsel %vm1394, %v1198, %v1393
        %vm1396 = vcmp.eq.f32.partialorder %v1198, 0.0
        %v1397 = vand.u32 %v1198, 2147483648
        %v1398 = vsel %vm1396, %v1397, %v1395
        %v1399 = vmul.f32 %v1265, 0.5
        %v1400 = vmul.f32 %v1272, 0.5
        %v1401 = vmul.f32 %v1279, 0.5
        %v1402 = vmul.f32 %v1286, 0.5
        %v1403 = vmul.f32 %v1293, 0.5
        %v1404 = vmul.f32 %v1300, 0.5
        %v1405 = vmul.f32 %v1307, 0.5
        %v1406 = vmul.f32 %v1314, 0.5
        %v1407 = vmul.f32 %v1321, 0.5
        %v1408 = vmul.f32 %v1328, 0.5
        %v1409 = vmul.f32 %v1335, 0.5
        %v1410 = vmul.f32 %v1342, 0.5
        %v1411 = vmul.f32 %v1349, 0.5
        %v1412 = vmul.f32 %v1356, 0.5
        %v1413 = vmul.f32 %v1363, 0.5
        %v1414 = vmul.f32 %v1370, 0.5
        %v1415 = vmul.f32 %v1377, 0.5
        %v1416 = vmul.f32 %v1384, 0.5
        %v1417 = vmul.f32 %v1391, 0.5
        %v1418 = vmul.f32 %v1398, 0.5
        %v1419 = vadd.f32 %v1239, %v1399
        %v1420 = vadd.f32 %v1240, %v1400
        %v1421 = vadd.f32 %v1241, %v1401
        %v1422 = vadd.f32 %v1242, %v1402
        %v1423 = vadd.f32 %v1243, %v1403
        %v1424 = vadd.f32 %v1244, %v1404
        %v1425 = vadd.f32 %v1245, %v1405
        %v1426 = vadd.f32 %v1246, %v1406
        %v1427 = vadd.f32 %v1247, %v1407
        %v1428 = vadd.f32 %v1248, %v1408
        %v1429 = vadd.f32 %v1249, %v1409
        %v1430 = vadd.f32 %v1250, %v1410
        %v1431 = vadd.f32 %v1251, %v1411
        %v1432 = vadd.f32 %v1252, %v1412
        %v1433 = vadd.f32 %v1253, %v1413
        %v1434 = vadd.f32 %v1254, %v1414
        %v1435 = vadd.f32 %v1255, %v1415
        %v1436 = vadd.f32 %v1256, %v1416
        %v1437 = vadd.f32 %v1257, %v1417
        %v1438 = vadd.f32 %v1258, %v1418
        %v1439 = vmul.f32 %v399, 0.25
        %v1440 = vmul.f32 %v400, 0.25
        %v1441 = vmul.f32 %v401, 0.25
        %v1442 = vmul.f32 %v402, 0.25
        %v1443 = vmul.f32 %v403, 0.25
        %v1444 = vmul.f32 %v404, 0.25
        %v1445 = vmul.f32 %v405, 0.25
        %v1446 = vmul.f32 %v406, 0.25
        %v1447 = vmul.f32 %v407, 0.25
        %v1448 = vmul.f32 %v408, 0.25
        %v1449 = vmul.f32 %v409, 0.25
        %v1450 = vmul.f32 %v410, 0.25
        %v1451 = vmul.f32 %v411, 0.25
        %v1452 = vmul.f32 %v412, 0.25
        %v1453 = vmul.f32 %v413, 0.25
        %v1454 = vmul.f32 %v414, 0.25
        %v1455 = vmul.f32 %v415, 0.25
        %v1456 = vmul.f32 %v416, 0.25
        %v1457 = vmul.f32 %v417, 0.25
        %v1458 = vmul.f32 %v418, 0.25
        %v1459 = vmul.f32 %v739, 0.75
        %v1460 = vmul.f32 %v740, 0.75
        %v1461 = vmul.f32 %v741, 0.75
        %v1462 = vmul.f32 %v742, 0.75
        %v1463 = vmul.f32 %v743, 0.75
        %v1464 = vmul.f32 %v744, 0.75
        %v1465 = vmul.f32 %v745, 0.75
        %v1466 = vmul.f32 %v746, 0.75
        %v1467 = vmul.f32 %v747, 0.75
        %v1468 = vmul.f32 %v748, 0.75
        %v1469 = vmul.f32 %v749, 0.75
        %v1470 = vmul.f32 %v750, 0.75
        %v1471 = vmul.f32 %v751, 0.75
        %v1472 = vmul.f32 %v752, 0.75
        %v1473 = vmul.f32 %v753, 0.75
        %v1474 = vmul.f32 %v754, 0.75
        %v1475 = vmul.f32 %v755, 0.75
        %v1476 = vmul.f32 %v756, 0.75
        %v1477 = vmul.f32 %v757, 0.75
        %v1478 = vmul.f32 %v758, 0.75
        %v1479 = vadd.f32 %v1439, %v1459
        %v1480 = vadd.f32 %v1440, %v1460
        %v1481 = vadd.f32 %v1441, %v1461
        %v1482 = vadd.f32 %v1442, %v1462
        %v1483 = vadd.f32 %v1443, %v1463
        %v1484 = vadd.f32 %v1444, %v1464
        %v1485 = vadd.f32 %v1445, %v1465
        %v1486 = vadd.f32 %v1446, %v1466
        %v1487 = vadd.f32 %v1447, %v1467
        %v1488 = vadd.f32 %v1448, %v1468
        %v1489 = vadd.f32 %v1449, %v1469
        %v1490 = vadd.f32 %v1450, %v1470
        %v1491 = vadd.f32 %v1451, %v1471
        %v1492 = vadd.f32 %v1452, %v1472
        %v1493 = vadd.f32 %v1453, %v1473
        %v1494 = vadd.f32 %v1454, %v1474
        %v1495 = vadd.f32 %v1455, %v1475
        %v1496 = vadd.f32 %v1456, %v1476
        %v1497 = vadd.f32 %v1457, %v1477
        %v1498 = vadd.f32 %v1458, %v1478
        %v1499 = vmul.f32 %v1479, %v1039
        %v1500 = vmul.f32 %v1480, %v1040
        %v1501 = vmul.f32 %v1481, %v1041
        %v1502 = vmul.f32 %v1482, %v1042
        %v1503 = vmul.f32 %v1483, %v1043
        %v1504 = vmul.f32 %v1484, %v1044
        %v1505 = vmul.f32 %v1485, %v1045
        %v1506 = vmul.f32 %v1486, %v1046
        %v1507 = vmul.f32 %v1487, %v1047
        %v1508 = vmul.f32 %v1488, %v1048
        %v1509 = vmul.f32 %v1489, %v1049
        %v1510 = vmul.f32 %v1490, %v1050
        %v1511 = vmul.f32 %v1491, %v1051
        %v1512 = vmul.f32 %v1492, %v1052
        %v1513 = vmul.f32 %v1493, %v1053
        %v1514 = vmul.f32 %v1494, %v1054
        %v1515 = vmul.f32 %v1495, %v1055
        %v1516 = vmul.f32 %v1496, %v1056
        %v1517 = vmul.f32 %v1497, %v1057
        %v1518 = vmul.f32 %v1498, %v1058
        %v1519 = vmul.f32 %v1499, %v1419
        %v1520 = vmul.f32 %v1500, %v1420
        %v1521 = vmul.f32 %v1501, %v1421
        %v1522 = vmul.f32 %v1502, %v1422
        %v1523 = vmul.f32 %v1503, %v1423
        %v1524 = vmul.f32 %v1504, %v1424
        %v1525 = vmul.f32 %v1505, %v1425
        %v1526 = vmul.f32 %v1506, %v1426
        %v1527 = vmul.f32 %v1507, %v1427
        %v1528 = vmul.f32 %v1508, %v1428
        %v1529 = vmul.f32 %v1509, %v1429
        %v1530 = vmul.f32 %v1510, %v1430
        %v1531 = vmul.f32 %v1511, %v1431
        %v1532 = vmul.f32 %v1512, %v1432
        %v1533 = vmul.f32 %v1513, %v1433
        %v1534 = vmul.f32 %v1514, %v1434
        %v1535 = vmul.f32 %v1515, %v1435
        %v1536 = vmul.f32 %v1516, %v1436
        %v1537 = vmul.f32 %v1517, %v1437
        %v1538 = vmul.f32 %v1518, %v1438
        %p1539 = scmp.eq.s32.totalorder %s20, 1
        %p1540 = scmp.ne.s32.totalorder %s20, 1
        // Predicated region
        $region45: #{cyclical_focal_loss.1} parent=31 // pred_check
          %p1541 = pneg %p1540
        $region46: #{cyclical_focal_loss.1} parent=31 // pred_check_branch
          %1543 = sbr.rel (%p1541) target = $region48
        $region47: #{cyclical_focal_loss.1} parent=31 // pred_region
          %v1544 = vadd.f32 %v1519, %v1520
          %v1545 = vadd.f32 %v1544, %v1521
          %v1546 = vadd.f32 %v1545, %v1522
          %v1547 = vadd.f32 %v1546, %v1523
          %v1548 = vadd.f32 %v1547, %v1524
          %v1549 = vadd.f32 %v1548, %v1525
          %v1550 = vadd.f32 %v1549, %v1526
          %v1551 = vadd.f32 %v1550, %v1527
          %v1552 = vadd.f32 %v1551, %v1528
          %v1553 = vadd.f32 %v1552, %v1529
          %v1554 = vadd.f32 %v1553, %v1530
          %v1555 = vadd.f32 %v1554, %v1531
          %v1556 = vadd.f32 %v1555, %v1532
          %v1557 = vadd.f32 %v1556, %v1533
          %v1558 = vadd.f32 %v1557, %v1534
          %v1559 = vadd.f32 %v1558, %v1535
          %v1560 = vadd.f32 %v1559, %v1536
          %v1561 = vadd.f32 %v1560, %v1537
          %v1562 = vadd.f32 %v1561, %v1538
          %1563 = vst [vmem:[%s298] sm:$0xff] %v1562
        $region48: #{cyclical_focal_loss.1} parent=31 // pred_fallthru
          _
        // Predicated region
        $region49: #{cyclical_focal_loss.1} parent=31 // pred_check
          %p1564 = pneg %p1539
        $region50: #{cyclical_focal_loss.1} parent=31 // pred_check_branch
          %1566 = sbr.rel (%p1564) target = $region52
        $region51: #{cyclical_focal_loss.1} parent=31 // pred_region
          %v1567 = vlaneseq
          %v1568 = vshrl.u32 %v1567, 7
          %v1569 = vadd.s32 %v1568, 8
          %v1570 = vadd.s32 %v1568, 16
          %v1571 = vadd.s32 %v1568, 24
          %v1572 = vadd.s32 %v1568, 32
          %v1573 = vadd.s32 %v1568, 40
          %v1574 = vadd.s32 %v1568, 48
          %v1575 = vadd.s32 %v1568, 56
          %v1576 = vadd.s32 %v1568, 64
          %v1577 = vadd.s32 %v1568, 72
          %v1578 = vadd.s32 %v1568, 80
          %v1579 = vadd.s32 %v1568, 88
          %v1580 = vadd.s32 %v1568, 96
          %v1581 = vadd.s32 %v1568, 104
          %v1582 = vadd.s32 %v1568, 112
          %v1583 = vadd.s32 %v1568, 120
          %v1584 = vadd.s32 %v1568, 128
          %v1585 = vadd.s32 %v1568, 136
          %v1586 = vadd.s32 %v1568, 144
          %v1587 = vadd.s32 %v1568, 152
          %s1588 = smul.u32 %s20, 160
          %v1589 = vstv %s1588
          %v1590 = vadd.s32 %v1589, %v1568
          %v1591 = vadd.s32 %v1589, %v1569
          %v1592 = vadd.s32 %v1589, %v1570
          %v1593 = vadd.s32 %v1589, %v1571
          %v1594 = vadd.s32 %v1589, %v1572
          %v1595 = vadd.s32 %v1589, %v1573
          %v1596 = vadd.s32 %v1589, %v1574
          %v1597 = vadd.s32 %v1589, %v1575
          %v1598 = vadd.s32 %v1589, %v1576
          %v1599 = vadd.s32 %v1589, %v1577
          %v1600 = vadd.s32 %v1589, %v1578
          %v1601 = vadd.s32 %v1589, %v1579
          %v1602 = vadd.s32 %v1589, %v1580
          %v1603 = vadd.s32 %v1589, %v1581
          %v1604 = vadd.s32 %v1589, %v1582
          %v1605 = vadd.s32 %v1589, %v1583
          %v1606 = vadd.s32 %v1589, %v1584
          %v1607 = vadd.s32 %v1589, %v1585
          %v1608 = vadd.s32 %v1589, %v1586
          %v1609 = vadd.s32 %v1589, %v1587
          %vm1610 = vcmp.lt.s32.totalorder %v1590, 300
          %vm1611 = vcmp.lt.s32.totalorder %v1591, 300
          %vm1612 = vcmp.lt.s32.totalorder %v1592, 300
          %vm1613 = vcmp.lt.s32.totalorder %v1593, 300
          %vm1614 = vcmp.lt.s32.totalorder %v1594, 300
          %vm1615 = vcmp.lt.s32.totalorder %v1595, 300
          %vm1616 = vcmp.lt.s32.totalorder %v1596, 300
          %vm1617 = vcmp.lt.s32.totalorder %v1597, 300
          %vm1618 = vcmp.lt.s32.totalorder %v1598, 300
          %vm1619 = vcmp.lt.s32.totalorder %v1599, 300
          %vm1620 = vcmp.lt.s32.totalorder %v1600, 300
          %vm1621 = vcmp.lt.s32.totalorder %v1601, 300
          %vm1622 = vcmp.lt.s32.totalorder %v1602, 300
          %vm1623 = vcmp.lt.s32.totalorder %v1603, 300
          %vm1624 = vcmp.lt.s32.totalorder %v1604, 300
          %vm1625 = vcmp.lt.s32.totalorder %v1605, 300
          %vm1626 = vcmp.lt.s32.totalorder %v1606, 300
          %vm1627 = vcmp.lt.s32.totalorder %v1607, 300
          %vm1628 = vcmp.lt.s32.totalorder %v1608, 300
          %vm1629 = vcmp.lt.s32.totalorder %v1609, 300
          %v1630 = vsel %vm1610, %v1519, 0.0
          %v1631 = vsel %vm1611, %v1520, 0.0
          %v1632 = vsel %vm1612, %v1521, 0.0
          %v1633 = vsel %vm1613, %v1522, 0.0
          %v1634 = vsel %vm1614, %v1523, 0.0
          %v1635 = vsel %vm1615, %v1524, 0.0
          %v1636 = vsel %vm1616, %v1525, 0.0
          %v1637 = vsel %vm1617, %v1526, 0.0
          %v1638 = vsel %vm1618, %v1527, 0.0
          %v1639 = vsel %vm1619, %v1528, 0.0
          %v1640 = vsel %vm1620, %v1529, 0.0
          %v1641 = vsel %vm1621, %v1530, 0.0
          %v1642 = vsel %vm1622, %v1531, 0.0
          %v1643 = vsel %vm1623, %v1532, 0.0
          %v1644 = vsel %vm1624, %v1533, 0.0
          %v1645 = vsel %vm1625, %v1534, 0.0
          %v1646 = vsel %vm1626, %v1535, 0.0
          %v1647 = vsel %vm1627, %v1536, 0.0
          %v1648 = vsel %vm1628, %v1537, 0.0
          %v1649 = vsel %vm1629, %v1538, 0.0
          %v1650 = vadd.f32 %v1630, %v1631
          %v1651 = vadd.f32 %v1650, %v1632
          %v1652 = vadd.f32 %v1651, %v1633
          %v1653 = vadd.f32 %v1652, %v1634
          %v1654 = vadd.f32 %v1653, %v1635
          %v1655 = vadd.f32 %v1654, %v1636
          %v1656 = vadd.f32 %v1655, %v1637
          %v1657 = vadd.f32 %v1656, %v1638
          %v1658 = vadd.f32 %v1657, %v1639
          %v1659 = vadd.f32 %v1658, %v1640
          %v1660 = vadd.f32 %v1659, %v1641
          %v1661 = vadd.f32 %v1660, %v1642
          %v1662 = vadd.f32 %v1661, %v1643
          %v1663 = vadd.f32 %v1662, %v1644
          %v1664 = vadd.f32 %v1663, %v1645
          %v1665 = vadd.f32 %v1664, %v1646
          %v1666 = vadd.f32 %v1665, %v1647
          %v1667 = vadd.f32 %v1666, %v1648
          %v1668 = vadd.f32 %v1667, %v1649
          %1669 = vst [vmem:[%s298] sm:$0xff] %v1668
        $region52: #{cyclical_focal_loss.1} parent=31 // pred_fallthru
          _
        %p1670 = scmp.lt.s32.totalorder %s20, 1
        %s1671 = scalar_select %p1670, %s20, 1
        %s1672 = smul.addr %s1671, 8
        %s1673 = scalar_lea.vmem %s3, %s1672
        // Predicated region
        $region53: #{cyclical_focal_loss.1} parent=31 // pred_check
          %p1674 = pneg %p116
        $region54: #{cyclical_focal_loss.1} parent=31 // pred_check_branch
          %1676 = sbr.rel (%p1674) target = $region56
        $region55: #{cyclical_focal_loss.1} parent=31 // pred_region
          _
        $region56: #{cyclical_focal_loss.1} parent=31 // pred_fallthru
          _
      $region32: #{cyclical_focal_loss.1} parent=5 // pred_fallthru
        _
      %p1677 = scmp.le.s32.totalorder 2, %s15
      // Predicated region
      $region57: #{cyclical_focal_loss.1} parent=5 // pred_check
        %p1678 = pneg %p1677
      $region58: #{cyclical_focal_loss.1} parent=5 // pred_check_branch
        %1680 = sbr.rel (%p1678) target = $region60
      $region59: #{cyclical_focal_loss.1} parent=5 // pred_region
        %s1681 = ssub.s32 %s15, 2
        // Predicated region
        $region61: #{cyclical_focal_loss.1} parent=59 // pred_check
          %p1682 = pneg %p122
        $region62: #{cyclical_focal_loss.1} parent=59 // pred_check_branch
          %1684 = sbr.rel (%p1682) target = $region64
        $region63: #{cyclical_focal_loss.1} parent=59 // pred_region
          %p1685 = scmp.lt.s32.totalorder %s21, 1
          %s1686 = scalar_select %p1685, %s21, 1
          %s1687 = smul.addr %s1686, 8
          %s1688 = scalar_lea.vmem %s3, %s1687
        $region64: #{cyclical_focal_loss.1} parent=59 // pred_fallthru
          _
      $region60: #{cyclical_focal_loss.1} parent=5 // pred_fallthru
        _
    $region6: #{cyclical_focal_loss.1} parent=1 // loop_footer
      %s19 = sadd.s32 1, %s15
    $region7: #{cyclical_focal_loss.1} parent=1 // loop_footer_branch
      %14 = sbr.rel target = $region3
    $region8: #{cyclical_focal_loss.1} parent=1 // loop_exit
      _
    %1689 = vsyncpa [#allocation3], 1
    %s1690 = scalar_lea.sflag [#allocation3], 1
    %1691 = vsyncpa %s1690, 1
    %1692 = vsyncpa [#allocation5], 1
    %s1693 = scalar_lea.sflag [#allocation5], 1
    %1694 = vsyncpa %s1693, 1

</llo_original>
